<compile_context>
chip_gen: v6e
topology: v6e:2x2x1
jax: 0.10.0
libtpu: 0.0.40
codegen_flags: <defaults>
</compile_context>

<pallas_src>
import functools
import numpy as np
import jax
import jax.numpy as jnp
from jax.experimental import pallas as pl
from jax.experimental.pallas import tpu as pltpu

CP = 128  # lane width of the fused head output (col 0 = value, 1..1+A = probs)


# ----------------------------------------------------------------------------
# Fused Pallas kernel: entire forward pass
# ----------------------------------------------------------------------------
def _fused_forward_kernel(cols1_ref, w1_ref, b1_ref,
                          w2_ref, b2_ref,
                          w3_ref, b3_ref,
                          wfc_ref, bfc_ref,
                          wh_ref, bh_ref,
                          out_ref, *, n_actions, qh, qw, k2, k3):
    f32 = jnp.float32
    bf16 = jnp.bfloat16
    B = out_ref.shape[0]
    nq = qh * qw               # padded per-batch spatial block (qh x qw rows)
    nrows2 = B * nq            # conv2/conv3 padded row count

    # ---- conv1 as a single GEMM over the wrapper-built im2col rows ----------
    # cols1 rows are ordered (ry, rx, b, qy, qx) with conv1 output pixel
    # (b, y1 = 2*qy + ry, x1 = 2*qx + rx).
    x1 = jnp.dot(cols1_ref[...], w1_ref[...], preferred_element_type=f32)
    x1 = jnp.maximum(x1 + b1_ref[...], 0.0)                  # (4*B*nq, 32) f32

    def shifted(x, off):
        # out[r] = x[r + off]; the wrap-around only lands on rows never read.
        if off == 0:
            return x
        return jnp.concatenate([x[off:, :], x[:off, :]], axis=0)

    # ---- conv2 (k=4, s=2): parity-quarter decomposition -> one stacked-K GEMM
    # kernel position (ki, kj) reads quarter (ki%2, kj%2), row-shifted by
    # (ki//2)*qw + (kj//2).  Shifts are shared across quarters, so only a
    # handful of shifted copies are built.
    shifts2 = sorted({(ki // 2) * qw + (kj // 2)
                      for ki in range(k2) for kj in range(k2)})
    x1_sh = {off: shifted(x1, off) for off in shifts2}
    pieces2 = []
    for ki in range(k2):
        for kj in range(k2):
            off = (ki // 2) * qw + (kj // 2)
            qs = ((ki % 2) * 2 + (kj % 2)) * nrows2          # aligned quarter start
            pieces2.append(x1_sh[off][qs:qs + nrows2, :])
    patches2 = jnp.concatenate(pieces2, axis=1).astype(bf16)  # (B*nq, k2*k2*32)
    x2 = jnp.dot(patches2, w2_ref[...], preferred_element_type=f32)
    x2 = jnp.maximum(x2 + b2_ref[...], 0.0)                   # (B*nq, 64) f32
    # valid conv2 outputs live at rows b*nq + oy*qw + ox  (oy, ox < 3)

    # ---- conv3 (k=3, s=1): row shifts -> one stacked-K GEMM ------------------
    pieces3 = [shifted(x2, ki * qw + kj)
               for ki in range(k3) for kj in range(k3)]
    patches3 = jnp.concatenate(pieces3, axis=1).astype(bf16)  # (B*nq, k3*k3*64)
    x3 = jnp.dot(patches3, w3_ref[...], preferred_element_type=f32)
    x3 = jnp.maximum(x3 + b3_ref[...], 0.0)                   # (B*nq, 64) f32
    # conv3 output is 1x1 spatial -> the valid row of batch b is row b*nq.

    hin = jnp.concatenate([x3[b * nq:b * nq + 1, :] for b in range(B)], axis=0)

    # ---- fc1 + fused critic/actor head, kept in f32 for value precision -----
    h = jnp.dot(hin, wfc_ref[...], preferred_element_type=f32) + bfc_ref[...]
    h = jnp.maximum(h, 0.0)                                   # (B, 512)
    head = jnp.dot(h, wh_ref[...], preferred_element_type=f32) + bh_ref[...]

    # masked exact softmax over the actor columns (1 .. 1+A); col 0 is the value.
    col = jax.lax.broadcasted_iota(jnp.int32, head.shape, 1)
    amask = jnp.logical_and(col >= 1, col < 1 + n_actions)
    logits = jnp.where(amask, head, -1e30)
    m = jnp.max(logits, axis=-1, keepdims=True)
    e = jnp.exp(logits - m)                                   # padded cols -> 0
    denom = jnp.sum(e, axis=-1, keepdims=True)
    probs = e * pl.reciprocal(denom, approx=False)            # exact: sums to 1

    # single unmasked, lane-dense store: col 0 = value, cols 1..1+A = probs.
    out_ref[...] = jnp.where(col == 0, head, probs)


def _full_spec(a):
    nd = a.ndim
    return pl.BlockSpec(a.shape, lambda *args, _nd=nd: (0,) * _nd)


def actor_critic_forward(prep, x_nchw, n_actions):
    """Full fused-Pallas forward. Returns (probs (B, A), value (B, 1))."""
    B, c_in, H, W = x_nchw.shape
    x = jnp.transpose(x_nchw, (0, 2, 3, 1))                   # NCHW -> NHWC
    # conv1 im2col on the raw (tiny) input stays in the same jit as the kernel;
    # downstream layers never touch HBM.
    # TODO(synk): building these patches fully in-kernel would need strided
    # windows over the raw 36-wide lane dim; left as wrapper-side XLA ops.
    cols1, oh1, ow1 = im2col(x, 8, 8, 4)                      # (B, oh1, ow1, 8*8*Cin)
    qh, qw = oh1 // 2, ow1 // 2
    K0 = cols1.shape[-1]
    # reorder rows to (ry, rx, b, qy, qx) so conv2's stride-2 gather becomes
    # aligned slices + row shifts inside the kernel.
    cols1 = cols1.reshape(B, qh, 2, qw, 2, K0)
    cols1 = jnp.transpose(cols1, (2, 4, 0, 1, 3, 5)).reshape(4 * B * qh * qw, K0)
    cols1 = cols1.astype(jnp.bfloat16)

    args = (cols1, prep["W1"], prep["b1"],
            prep["W2"], prep["b2"],
            prep["W3"], prep["b3"],
            prep["Wfc"], prep["bfc"],
            prep["Wh"], prep["bh"])

    kernel = functools.partial(_fused_forward_kernel, n_actions=n_actions,
                               qh=qh, qw=qw, k2=4, k3=3)
    out = pl.pallas_call(
        kernel,
        out_shape=jax.ShapeDtypeStruct((B, CP), jnp.float32),
        grid=(1,),  # whole net fits in < 1 MiB VMEM -> single fused invocation
        in_specs=[_full_spec(a) for a in args],
        out_specs=pl.BlockSpec((B, CP), lambda i: (0, 0)),
        compiler_params=pltpu.CompilerParams(dimension_semantics=("arbitrary",)),
    )(*args)

    value = out[:, 0:1]
    probs = out[:, 1:1 + n_actions]
    return probs, value


# ----------------------------------------------------------------------------
# im2col (conv1 feed + pure-JAX reference)
# ----------------------------------------------------------------------------
def im2col(x_nhwc, kh, kw, stride):
    """Extract conv patches -> (B, OH, OW, KH*KW*Cin), column order (kh, kw, c)."""
    B, H, W, C = x_nhwc.shape
    oh = (H - kh) // stride + 1
    ow = (W - kw) // stride + 1
    patches = []
    for i in range(kh):
        for j in range(kw):
            patches.append(
                x_nhwc[:, i: i + stride * oh: stride, j: j + stride * ow: stride, :]
            )
    cols = jnp.stack(patches, axis=3)                         # (B, oh, ow, kh*kw, C)
    return cols.reshape(B, oh, ow, kh * kw * C), oh, ow


# ----------------------------------------------------------------------------
# Parameter construction (torch layouts) and one-time inference prep
# ----------------------------------------------------------------------------
def orthogonal_init(key, shape, gain):
    rows = shape[0]
    cols = int(np.prod(shape[1:]))
    a = jax.random.normal(key, (max(rows, cols), min(rows, cols)), dtype=jnp.float32)
    q, r = jnp.linalg.qr(a)
    q = q * jnp.where(jnp.diag(r) >= 0, 1.0, -1.0)[None, :]
    if rows < cols:
        q = q.T
    return (gain * q[:rows, :cols]).reshape(shape).astype(jnp.float32)


def make_params(key, input_dims, n_actions):
    c_in, H, W = input_dims
    h1, w1 = (H - 8) // 4 + 1, (W - 8) // 4 + 1
    h2, w2 = (h1 - 4) // 2 + 1, (w1 - 4) // 2 + 1
    h3, w3 = (h2 - 3) // 1 + 1, (w2 - 3) // 1 + 1
    fc1_in = 64 * h3 * w3

    ks = jax.random.split(key, 6)
    sqrt2 = float(np.sqrt(2.0))
    params = {
        "conv1_w": orthogonal_init(ks[0], (32, c_in, 8, 8), sqrt2),
        "conv1_b": jnp.zeros((32,), jnp.float32),
        "conv2_w": orthogonal_init(ks[1], (64, 32, 4, 4), sqrt2),
        "conv2_b": jnp.zeros((64,), jnp.float32),
        "conv3_w": orthogonal_init(ks[2], (64, 64, 3, 3), sqrt2),
        "conv3_b": jnp.zeros((64,), jnp.float32),
        "fc1_w": orthogonal_init(ks[3], (512, fc1_in), sqrt2),    # torch (out, in)
        "fc1_b": jnp.zeros((512,), jnp.float32),
        "critic_w": orthogonal_init(ks[4], (1, 512), 1.0),
        "critic_b": jnp.zeros((1,), jnp.float32),
        "actor_w": orthogonal_init(ks[5], (n_actions, 512), 0.01),
        "actor_b": jnp.zeros((n_actions,), jnp.float32),
    }
    return params, fc1_in


def prepare_inference_params(params, input_dims, n_actions):
    """One-time repack (batch-size independent): fold torch transposes, stack the
    per-kernel-position conv weights along K, fuse critic+actor into one 128-lane
    head, cast the big conv weights to bf16 (fc1/head kept f32 for value precision)."""
    c_in, H, W = input_dims

    def osz(n, k, s):
        return (n - k) // s + 1

    oh1, ow1 = osz(H, 8, 4), osz(W, 8, 4)
    oh2, ow2 = osz(oh1, 4, 2), osz(ow1, 4, 2)
    oh3, ow3 = osz(oh2, 3, 1), osz(ow2, 3, 1)
    assert oh1 % 2 == 0 and ow1 % 2 == 0, "stride-2 quarter split needs even conv1 output"
    # TODO(synk): general (>1x1) conv3 spatial would also need the NCHW-flatten
    # permutation folded into Wfc; not needed for this input size.
    assert oh3 == 1 and ow3 == 1
    assert n_actions + 1 <= CP

    # conv1: (32, cin, 8, 8) -> (8*8*cin, 32), row order (kh, kw, cin)
    w1 = np.asarray(params["conv1_w"], np.float32)
    W1 = np.transpose(w1, (2, 3, 1, 0)).reshape(8 * 8 * c_in, 32)
    b1 = np.asarray(params["conv1_b"], np.float32).reshape(1, 32)

    def stack_k(w, k):
        wnp = np.asarray(w, np.float32)                        # (cout, cin, k, k)
        blocks = [wnp[:, :, ki, kj].T for ki in range(k) for kj in range(k)]
        return np.concatenate(blocks, axis=0)                  # (k*k*cin, cout)

    W2 = stack_k(params["conv2_w"], 4)                         # (512, 64)
    b2 = np.asarray(params["conv2_b"], np.float32).reshape(1, 64)
    W3 = stack_k(params["conv3_w"], 3)                         # (576, 64)
    b3 = np.asarray(params["conv3_b"], np.float32).reshape(1, 64)

    Wfc = np.asarray(params["fc1_w"], np.float32).T            # (64, 512)
    bfc = np.asarray(params["fc1_b"], np.float32).reshape(1, 512)

    # fused critic + actor heads: col 0 = value, cols 1..1+A = actor logits.
    A = n_actions
    Wh = np.zeros((512, CP), np.float32)
    Wh[:, 0] = np.asarray(params["critic_w"], np.float32)[0]
    Wh[:, 1:1 + A] = np.asarray(params["actor_w"], np.float32).T
    bh = np.zeros((1, CP), np.float32)
    bh[0, 0] = float(np.asarray(params["critic_b"], np.float32)[0])
    bh[0, 1:1 + A] = np.asarray(params["actor_b"], np.float32)

    bf = jnp.bfloat16
    return {
        "W1": jnp.asarray(W1, bf), "b1": jnp.asarray(b1),
        "W2": jnp.asarray(W2, bf), "b2": jnp.asarray(b2),
        "W3": jnp.asarray(W3, bf), "b3": jnp.asarray(b3),
        "Wfc": jnp.asarray(Wfc), "bfc": jnp.asarray(bfc),
        "Wh": jnp.asarray(Wh), "bh": jnp.asarray(bh),
    }


# ----------------------------------------------------------------------------
# Pure-JAX f32 reference (torch semantics) for sanity checking
# ----------------------------------------------------------------------------
def actor_critic_reference(params, x_nchw):
    B = x_nchw.shape[0]
    x = jnp.transpose(x_nchw, (0, 2, 3, 1))

    def conv(x, w, b, s):
        cout, cin, kh, kw = w.shape
        cols, oh, ow = im2col(x, kh, kw, s)
        wm = jnp.transpose(w, (2, 3, 1, 0)).reshape(kh * kw * cin, cout)
        o = jnp.maximum(cols.reshape(B * oh * ow, -1) @ wm + b[None, :], 0.0)
        return o.reshape(B, oh, ow, cout)

    x = conv(x, params["conv1_w"], params["conv1_b"], 4)
    x = conv(x, params["conv2_w"], params["conv2_b"], 2)
    x = conv(x, params["conv3_w"], params["conv3_b"], 1)
    flat = jnp.transpose(x, (0, 3, 1, 2)).reshape(B, -1)       # torch .view on NCHW
    h = jnp.maximum(flat @ params["fc1_w"].T + params["fc1_b"], 0.0)
    value = h @ params["critic_w"].T + params["critic_b"]
    logits = h @ params["actor_w"].T + params["actor_b"]
    probs = jax.nn.softmax(logits, axis=1)
    return probs, value


if __name__ == "__main__":
    B = 2
    input_dims = (4, 36, 36)   # conv spatial: 36 -> 8 -> 3 -> 1, fc1_in = 64
    n_actions = 6

    key = jax.random.PRNGKey(0)
    pkey, xkey = jax.random.split(key)
    params, fc1_in = make_params(pkey, input_dims, n_actions)
    prep = prepare_inference_params(params, input_dims, n_actions)

    x = jax.random.normal(xkey, (B,) + input_dims, dtype=jnp.float32)

    fwd = jax.jit(actor_critic_forward, static_argnums=(2,))
    probs, value = fwd(prep, x, n_actions)
    probs = jax.block_until_ready(probs)
    value = jax.block_until_ready(value)

    probs_ref, value_ref = actor_critic_reference(params, x)
    assert probs.shape == (B, n_actions) and value.shape == (B, 1)
    # conv stack uses bf16 MXU inputs (f32 accumulate); fc1/head are f32.
    np.testing.assert_allclose(np.asarray(probs), np.asarray(probs_ref),
                               rtol=1e-2, atol=1e-2)
    np.testing.assert_allclose(np.asarray(value), np.asarray(value_ref),
                               rtol=5e-2, atol=5e-2)
    # exact softmax reciprocal -> probabilities sum to 1
    np.testing.assert_allclose(np.asarray(probs).sum(axis=1), np.ones(B), atol=1e-3)

    print("KERNEL_OK")
</pallas_src>

<mosaic_0001>
module attributes {stable_mosaic.version = 11 : i64} {
  func.func @_fused_forward_kernel(%arg0: i32, %arg1: memref<128x256xbf16, #tpu.memory_space<vmem>>, %arg2: memref<256x32xbf16, #tpu.memory_space<vmem>>, %arg3: memref<1x32xf32, #tpu.memory_space<vmem>>, %arg4: memref<512x64xbf16, #tpu.memory_space<vmem>>, %arg5: memref<1x64xf32, #tpu.memory_space<vmem>>, %arg6: memref<576x64xbf16, #tpu.memory_space<vmem>>, %arg7: memref<1x64xf32, #tpu.memory_space<vmem>>, %arg8: memref<64x512xf32, #tpu.memory_space<vmem>>, %arg9: memref<1x512xf32, #tpu.memory_space<vmem>>, %arg10: memref<512x128xf32, #tpu.memory_space<vmem>>, %arg11: memref<1x128xf32, #tpu.memory_space<vmem>>, %arg12: memref<2x128xf32, #tpu.memory_space<vmem>>) attributes {dimension_semantics = [#tpu.dimension_semantics<arbitrary>], iteration_bounds = array<i64: 1>, scalar_prefetch = 0 : i64, scratch_operands = 0 : i64, tpu.core_type = #tpu.core_type<tc>, window_params = [{pipeline_mode = #tpu.pipeline_mode<synchronous>, transform_indices = @transform_0, window_bounds = array<i64: 128, 256>}, {pipeline_mode = #tpu.pipeline_mode<synchronous>, transform_indices = @transform_1, window_bounds = array<i64: 256, 32>}, {pipeline_mode = #tpu.pipeline_mode<synchronous>, transform_indices = @transform_2, window_bounds = array<i64: 1, 32>}, {pipeline_mode = #tpu.pipeline_mode<synchronous>, transform_indices = @transform_3, window_bounds = array<i64: 512, 64>}, {pipeline_mode = #tpu.pipeline_mode<synchronous>, transform_indices = @transform_4, window_bounds = array<i64: 1, 64>}, {pipeline_mode = #tpu.pipeline_mode<synchronous>, transform_indices = @transform_5, window_bounds = array<i64: 576, 64>}, {pipeline_mode = #tpu.pipeline_mode<synchronous>, transform_indices = @transform_6, window_bounds = array<i64: 1, 64>}, {pipeline_mode = #tpu.pipeline_mode<synchronous>, transform_indices = @transform_7, window_bounds = array<i64: 64, 512>}, {pipeline_mode = #tpu.pipeline_mode<synchronous>, transform_indices = @transform_8, window_bounds = array<i64: 1, 512>}, {pipeline_mode = #tpu.pipeline_mode<synchronous>, transform_indices = @transform_9, window_bounds = array<i64: 512, 128>}, {pipeline_mode = #tpu.pipeline_mode<synchronous>, transform_indices = @transform_10, window_bounds = array<i64: 1, 128>}, {pipeline_mode = #tpu.pipeline_mode<synchronous>, transform_indices = @transform_11, window_bounds = array<i64: 2, 128>}]} {
    %c0 = arith.constant 0 : index
    %c0_0 = arith.constant 0 : index
    %0 = vector.load %arg1[%c0, %c0_0] : memref<128x256xbf16, #tpu.memory_space<vmem>>, vector<128x256xbf16>
    %c0_1 = arith.constant 0 : index
    %c0_2 = arith.constant 0 : index
    %1 = vector.load %arg2[%c0_1, %c0_2] : memref<256x32xbf16, #tpu.memory_space<vmem>>, vector<256x32xbf16>
    %cst = arith.constant dense<0.000000e+00> : vector<128x32xf32>
    %2 = tpu.matmul %0, %1, %cst {dimension_numbers = #tpu.dot_dimension_numbers<[1], [0], [0], [1], [0, 0, 1, 1], [], []>} : vector<128x256xbf16>, vector<256x32xbf16>, vector<128x32xf32> -> vector<128x32xf32>
    %c0_3 = arith.constant 0 : index
    %c0_4 = arith.constant 0 : index
    %3 = vector.load %arg3[%c0_3, %c0_4] : memref<1x32xf32, #tpu.memory_space<vmem>>, vector<1x32xf32>
    %4 = vector.broadcast %3 : vector<1x32xf32> to vector<128x32xf32>
    %5 = arith.addf %2, %4 : vector<128x32xf32>
    %cst_5 = arith.constant 0.000000e+00 : f32
    %6 = vector.broadcast %cst_5 : f32 to vector<128x32xf32>
    %7 = arith.maximumf %5, %6 : vector<128x32xf32>
    %8 = vector.extract_strided_slice %7 {offsets = [1, 0], sizes = [127, 32], strides = [1, 1]} : vector<128x32xf32> to vector<127x32xf32>
    %9 = vector.extract_strided_slice %7 {offsets = [0, 0], sizes = [1, 32], strides = [1, 1]} : vector<128x32xf32> to vector<1x32xf32>
    %10 = tpu.concatenate %8, %9 in 0 : vector<127x32xf32>, vector<1x32xf32> -> vector<128x32xf32>
    %11 = vector.extract_strided_slice %7 {offsets = [4, 0], sizes = [124, 32], strides = [1, 1]} : vector<128x32xf32> to vector<124x32xf32>
    %12 = vector.extract_strided_slice %7 {offsets = [0, 0], sizes = [4, 32], strides = [1, 1]} : vector<128x32xf32> to vector<4x32xf32>
    %13 = tpu.concatenate %11, %12 in 0 : vector<124x32xf32>, vector<4x32xf32> -> vector<128x32xf32>
    %14 = vector.extract_strided_slice %7 {offsets = [5, 0], sizes = [123, 32], strides = [1, 1]} : vector<128x32xf32> to vector<123x32xf32>
    %15 = vector.extract_strided_slice %7 {offsets = [0, 0], sizes = [5, 32], strides = [1, 1]} : vector<128x32xf32> to vector<5x32xf32>
    %16 = tpu.concatenate %14, %15 in 0 : vector<123x32xf32>, vector<5x32xf32> -> vector<128x32xf32>
    %17 = vector.extract_strided_slice %7 {offsets = [0, 0], sizes = [32, 32], strides = [1, 1]} : vector<128x32xf32> to vector<32x32xf32>
    %18 = vector.extract_strided_slice %7 {offsets = [32, 0], sizes = [32, 32], strides = [1, 1]} : vector<128x32xf32> to vector<32x32xf32>
    %19 = vector.extract_strided_slice %10 {offsets = [0, 0], sizes = [32, 32], strides = [1, 1]} : vector<128x32xf32> to vector<32x32xf32>
    %20 = vector.extract_strided_slice %10 {offsets = [32, 0], sizes = [32, 32], strides = [1, 1]} : vector<128x32xf32> to vector<32x32xf32>
    %21 = vector.extract_strided_slice %7 {offsets = [64, 0], sizes = [32, 32], strides = [1, 1]} : vector<128x32xf32> to vector<32x32xf32>
    %22 = vector.extract_strided_slice %7 {offsets = [96, 0], sizes = [32, 32], strides = [1, 1]} : vector<128x32xf32> to vector<32x32xf32>
    %23 = vector.extract_strided_slice %10 {offsets = [64, 0], sizes = [32, 32], strides = [1, 1]} : vector<128x32xf32> to vector<32x32xf32>
    %24 = vector.extract_strided_slice %10 {offsets = [96, 0], sizes = [32, 32], strides = [1, 1]} : vector<128x32xf32> to vector<32x32xf32>
    %25 = vector.extract_strided_slice %13 {offsets = [0, 0], sizes = [32, 32], strides = [1, 1]} : vector<128x32xf32> to vector<32x32xf32>
    %26 = vector.extract_strided_slice %13 {offsets = [32, 0], sizes = [32, 32], strides = [1, 1]} : vector<128x32xf32> to vector<32x32xf32>
    %27 = vector.extract_strided_slice %16 {offsets = [0, 0], sizes = [32, 32], strides = [1, 1]} : vector<128x32xf32> to vector<32x32xf32>
    %28 = vector.extract_strided_slice %16 {offsets = [32, 0], sizes = [32, 32], strides = [1, 1]} : vector<128x32xf32> to vector<32x32xf32>
    %29 = vector.extract_strided_slice %13 {offsets = [64, 0], sizes = [32, 32], strides = [1, 1]} : vector<128x32xf32> to vector<32x32xf32>
    %30 = vector.extract_strided_slice %13 {offsets = [96, 0], sizes = [32, 32], strides = [1, 1]} : vector<128x32xf32> to vector<32x32xf32>
    %31 = vector.extract_strided_slice %16 {offsets = [64, 0], sizes = [32, 32], strides = [1, 1]} : vector<128x32xf32> to vector<32x32xf32>
    %32 = vector.extract_strided_slice %16 {offsets = [96, 0], sizes = [32, 32], strides = [1, 1]} : vector<128x32xf32> to vector<32x32xf32>
    %33 = tpu.concatenate %17, %18, %19, %20, %21, %22, %23, %24, %25, %26, %27, %28, %29, %30, %31, %32 in 1 : vector<32x32xf32>, vector<32x32xf32>, vector<32x32xf32>, vector<32x32xf32>, vector<32x32xf32>, vector<32x32xf32>, vector<32x32xf32>, vector<32x32xf32>, vector<32x32xf32>, vector<32x32xf32>, vector<32x32xf32>, vector<32x32xf32>, vector<32x32xf32>, vector<32x32xf32>, vector<32x32xf32>, vector<32x32xf32> -> vector<32x512xf32>
    %34 = arith.truncf %33 : vector<32x512xf32> to vector<32x512xbf16>
    %c0_6 = arith.constant 0 : index
    %c0_7 = arith.constant 0 : index
    %35 = vector.load %arg4[%c0_6, %c0_7] : memref<512x64xbf16, #tpu.memory_space<vmem>>, vector<512x64xbf16>
    %cst_8 = arith.constant dense<0.000000e+00> : vector<32x64xf32>
    %36 = tpu.matmul %34, %35, %cst_8 {dimension_numbers = #tpu.dot_dimension_numbers<[1], [0], [0], [1], [0, 0, 1, 1], [], []>} : vector<32x512xbf16>, vector<512x64xbf16>, vector<32x64xf32> -> vector<32x64xf32>
    %c0_9 = arith.constant 0 : index
    %c0_10 = arith.constant 0 : index
    %37 = vector.load %arg5[%c0_9, %c0_10] : memref<1x64xf32, #tpu.memory_space<vmem>>, vector<1x64xf32>
    %38 = vector.broadcast %37 : vector<1x64xf32> to vector<32x64xf32>
    %39 = arith.addf %36, %38 : vector<32x64xf32>
    %cst_11 = arith.constant 0.000000e+00 : f32
    %40 = vector.broadcast %cst_11 : f32 to vector<32x64xf32>
    %41 = arith.maximumf %39, %40 : vector<32x64xf32>
    %42 = vector.extract_strided_slice %41 {offsets = [1, 0], sizes = [31, 64], strides = [1, 1]} : vector<32x64xf32> to vector<31x64xf32>
    %43 = vector.extract_strided_slice %41 {offsets = [0, 0], sizes = [1, 64], strides = [1, 1]} : vector<32x64xf32> to vector<1x64xf32>
    %44 = tpu.concatenate %42, %43 in 0 : vector<31x64xf32>, vector<1x64xf32> -> vector<32x64xf32>
    %45 = vector.extract_strided_slice %41 {offsets = [2, 0], sizes = [30, 64], strides = [1, 1]} : vector<32x64xf32> to vector<30x64xf32>
    %46 = vector.extract_strided_slice %41 {offsets = [0, 0], sizes = [2, 64], strides = [1, 1]} : vector<32x64xf32> to vector<2x64xf32>
    %47 = tpu.concatenate %45, %46 in 0 : vector<30x64xf32>, vector<2x64xf32> -> vector<32x64xf32>
    %48 = vector.extract_strided_slice %41 {offsets = [4, 0], sizes = [28, 64], strides = [1, 1]} : vector<32x64xf32> to vector<28x64xf32>
    %49 = vector.extract_strided_slice %41 {offsets = [0, 0], sizes = [4, 64], strides = [1, 1]} : vector<32x64xf32> to vector<4x64xf32>
    %50 = tpu.concatenate %48, %49 in 0 : vector<28x64xf32>, vector<4x64xf32> -> vector<32x64xf32>
    %51 = vector.extract_strided_slice %41 {offsets = [5, 0], sizes = [27, 64], strides = [1, 1]} : vector<32x64xf32> to vector<27x64xf32>
    %52 = vector.extract_strided_slice %41 {offsets = [0, 0], sizes = [5, 64], strides = [1, 1]} : vector<32x64xf32> to vector<5x64xf32>
    %53 = tpu.concatenate %51, %52 in 0 : vector<27x64xf32>, vector<5x64xf32> -> vector<32x64xf32>
    %54 = vector.extract_strided_slice %41 {offsets = [6, 0], sizes = [26, 64], strides = [1, 1]} : vector<32x64xf32> to vector<26x64xf32>
    %55 = vector.extract_strided_slice %41 {offsets = [0, 0], sizes = [6, 64], strides = [1, 1]} : vector<32x64xf32> to vector<6x64xf32>
    %56 = tpu.concatenate %54, %55 in 0 : vector<26x64xf32>, vector<6x64xf32> -> vector<32x64xf32>
    %57 = vector.extract_strided_slice %41 {offsets = [8, 0], sizes = [24, 64], strides = [1, 1]} : vector<32x64xf32> to vector<24x64xf32>
    %58 = vector.extract_strided_slice %41 {offsets = [0, 0], sizes = [8, 64], strides = [1, 1]} : vector<32x64xf32> to vector<8x64xf32>
    %59 = tpu.concatenate %57, %58 in 0 : vector<24x64xf32>, vector<8x64xf32> -> vector<32x64xf32>
    %60 = vector.extract_strided_slice %41 {offsets = [9, 0], sizes = [23, 64], strides = [1, 1]} : vector<32x64xf32> to vector<23x64xf32>
    %61 = vector.extract_strided_slice %41 {offsets = [0, 0], sizes = [9, 64], strides = [1, 1]} : vector<32x64xf32> to vector<9x64xf32>
    %62 = tpu.concatenate %60, %61 in 0 : vector<23x64xf32>, vector<9x64xf32> -> vector<32x64xf32>
    %63 = vector.extract_strided_slice %41 {offsets = [10, 0], sizes = [22, 64], strides = [1, 1]} : vector<32x64xf32> to vector<22x64xf32>
    %64 = vector.extract_strided_slice %41 {offsets = [0, 0], sizes = [10, 64], strides = [1, 1]} : vector<32x64xf32> to vector<10x64xf32>
    %65 = tpu.concatenate %63, %64 in 0 : vector<22x64xf32>, vector<10x64xf32> -> vector<32x64xf32>
    %66 = tpu.concatenate %41, %44, %47, %50, %53, %56, %59, %62, %65 in 1 : vector<32x64xf32>, vector<32x64xf32>, vector<32x64xf32>, vector<32x64xf32>, vector<32x64xf32>, vector<32x64xf32>, vector<32x64xf32>, vector<32x64xf32>, vector<32x64xf32> -> vector<32x576xf32>
    %67 = arith.truncf %66 : vector<32x576xf32> to vector<32x576xbf16>
    %c0_12 = arith.constant 0 : index
    %c0_13 = arith.constant 0 : index
    %68 = vector.load %arg6[%c0_12, %c0_13] : memref<576x64xbf16, #tpu.memory_space<vmem>>, vector<576x64xbf16>
    %cst_14 = arith.constant dense<0.000000e+00> : vector<32x64xf32>
    %69 = tpu.matmul %67, %68, %cst_14 {dimension_numbers = #tpu.dot_dimension_numbers<[1], [0], [0], [1], [0, 0, 1, 1], [], []>} : vector<32x576xbf16>, vector<576x64xbf16>, vector<32x64xf32> -> vector<32x64xf32>
    %c0_15 = arith.constant 0 : index
    %c0_16 = arith.constant 0 : index
    %70 = vector.load %arg7[%c0_15, %c0_16] : memref<1x64xf32, #tpu.memory_space<vmem>>, vector<1x64xf32>
    %71 = vector.broadcast %70 : vector<1x64xf32> to vector<32x64xf32>
    %72 = arith.addf %69, %71 : vector<32x64xf32>
    %cst_17 = arith.constant 0.000000e+00 : f32
    %73 = vector.broadcast %cst_17 : f32 to vector<32x64xf32>
    %74 = arith.maximumf %72, %73 : vector<32x64xf32>
    %75 = vector.extract_strided_slice %74 {offsets = [0, 0], sizes = [1, 64], strides = [1, 1]} : vector<32x64xf32> to vector<1x64xf32>
    %76 = vector.extract_strided_slice %74 {offsets = [16, 0], sizes = [1, 64], strides = [1, 1]} : vector<32x64xf32> to vector<1x64xf32>
    %77 = tpu.concatenate %75, %76 in 0 : vector<1x64xf32>, vector<1x64xf32> -> vector<2x64xf32>
    %c0_18 = arith.constant 0 : index
    %c0_19 = arith.constant 0 : index
    %78 = vector.load %arg8[%c0_18, %c0_19] : memref<64x512xf32, #tpu.memory_space<vmem>>, vector<64x512xf32>
    %cst_20 = arith.constant dense<0.000000e+00> : vector<2x512xf32>
    %79 = tpu.matmul %77, %78, %cst_20 {dimension_numbers = #tpu.dot_dimension_numbers<[1], [0], [0], [1], [0, 0, 1, 1], [], []>} : vector<2x64xf32>, vector<64x512xf32>, vector<2x512xf32> -> vector<2x512xf32>
    %c0_21 = arith.constant 0 : index
    %c0_22 = arith.constant 0 : index
    %80 = vector.load %arg9[%c0_21, %c0_22] : memref<1x512xf32, #tpu.memory_space<vmem>>, vector<1x512xf32>
    %81 = vector.broadcast %80 : vector<1x512xf32> to vector<2x512xf32>
    %82 = arith.addf %79, %81 : vector<2x512xf32>
    %cst_23 = arith.constant 0.000000e+00 : f32
    %83 = vector.broadcast %cst_23 : f32 to vector<2x512xf32>
    %84 = arith.maximumf %82, %83 : vector<2x512xf32>
    %c0_24 = arith.constant 0 : index
    %c0_25 = arith.constant 0 : index
    %85 = vector.load %arg10[%c0_24, %c0_25] : memref<512x128xf32, #tpu.memory_space<vmem>>, vector<512x128xf32>
    %cst_26 = arith.constant dense<0.000000e+00> : vector<2x128xf32>
    %86 = tpu.matmul %84, %85, %cst_26 {dimension_numbers = #tpu.dot_dimension_numbers<[1], [0], [0], [1], [0, 0, 1, 1], [], []>} : vector<2x512xf32>, vector<512x128xf32>, vector<2x128xf32> -> vector<2x128xf32>
    %c0_27 = arith.constant 0 : index
    %c0_28 = arith.constant 0 : index
    %87 = vector.load %arg11[%c0_27, %c0_28] : memref<1x128xf32, #tpu.memory_space<vmem>>, vector<1x128xf32>
    %88 = vector.broadcast %87 : vector<1x128xf32> to vector<2x128xf32>
    %89 = arith.addf %86, %88 : vector<2x128xf32>
    %90 = tpu.iota {dimensions = array<i32: 1>} : vector<2x128xi32>
    %c1_i32 = arith.constant 1 : i32
    %91 = vector.broadcast %c1_i32 : i32 to vector<2x128xi32>
    %92 = arith.cmpi sge, %90, %91 : vector<2x128xi32>
    %c7_i32 = arith.constant 7 : i32
    %93 = vector.broadcast %c7_i32 : i32 to vector<2x128xi32>
    %94 = arith.cmpi slt, %90, %93 : vector<2x128xi32>
    %95 = arith.andi %92, %94 : vector<2x128xi1>
    %cst_29 = arith.constant -1.000000e+30 : f32
    %96 = vector.broadcast %cst_29 : f32 to vector<2x128xf32>
    %97 = arith.select %95, %89, %96 : vector<2x128xi1>, vector<2x128xf32>
    %cst_30 = arith.constant dense<0xFF800000> : vector<2xf32>
    %98 = vector.multi_reduction <maximumf>, %97, %cst_30 [1] : vector<2x128xf32> to vector<2xf32>
    %99 = vector.shape_cast %98 : vector<2xf32> to vector<2x1xf32>
    %100 = vector.broadcast %99 : vector<2x1xf32> to vector<2x128xf32>
    %101 = arith.subf %97, %100 : vector<2x128xf32>
    %102 = math.exp %101 : vector<2x128xf32>
    %cst_31 = arith.constant dense<0.000000e+00> : vector<2xf32>
    %103 = vector.multi_reduction <add>, %102, %cst_31 [1] : vector<2x128xf32> to vector<2xf32>
    %104 = vector.shape_cast %103 : vector<2xf32> to vector<2x1xf32>
    %105 = tpu.reciprocal %104 : vector<2x1xf32> -> vector<2x1xf32>
    %106 = vector.broadcast %105 : vector<2x1xf32> to vector<2x128xf32>
    %107 = arith.mulf %102, %106 : vector<2x128xf32>
    %c0_i32 = arith.constant 0 : i32
    %108 = vector.broadcast %c0_i32 : i32 to vector<2x128xi32>
    %109 = arith.cmpi eq, %90, %108 : vector<2x128xi32>
    %110 = arith.select %109, %89, %107 : vector<2x128xi1>, vector<2x128xf32>
    %c0_32 = arith.constant 0 : index
    %c0_33 = arith.constant 0 : index
    %111 = vector.load %arg12[%c0_32, %c0_33] : memref<2x128xf32, #tpu.memory_space<vmem>>, vector<2x128xf32>
    tpu.vector_store %arg12[%c0_32, %c0_33], %110 {strides = array<i32>} : memref<2x128xf32, #tpu.memory_space<vmem>>, vector<2x128xf32>,
    return
  }
  func.func @transform_0(%arg0: i32) -> (i32, i32) {
    %c0_i32 = arith.constant 0 : i32
    %c0_i32_0 = arith.constant 0 : i32
    %c0_i32_1 = arith.constant 0 : i32
    return %c0_i32, %c0_i32_0 : i32, i32
  }
  func.func @transform_1(%arg0: i32) -> (i32, i32) {
    %c0_i32 = arith.constant 0 : i32
    %c0_i32_0 = arith.constant 0 : i32
    %c0_i32_1 = arith.constant 0 : i32
    return %c0_i32, %c0_i32_0 : i32, i32
  }
  func.func @transform_2(%arg0: i32) -> (i32, i32) {
    %c0_i32 = arith.constant 0 : i32
    %c0_i32_0 = arith.constant 0 : i32
    %c0_i32_1 = arith.constant 0 : i32
    return %c0_i32, %c0_i32_0 : i32, i32
  }
  func.func @transform_3(%arg0: i32) -> (i32, i32) {
    %c0_i32 = arith.constant 0 : i32
    %c0_i32_0 = arith.constant 0 : i32
    %c0_i32_1 = arith.constant 0 : i32
    return %c0_i32, %c0_i32_0 : i32, i32
  }
  func.func @transform_4(%arg0: i32) -> (i32, i32) {
    %c0_i32 = arith.constant 0 : i32
    %c0_i32_0 = arith.constant 0 : i32
    %c0_i32_1 = arith.constant 0 : i32
    return %c0_i32, %c0_i32_0 : i32, i32
  }
  func.func @transform_5(%arg0: i32) -> (i32, i32) {
    %c0_i32 = arith.constant 0 : i32
    %c0_i32_0 = arith.constant 0 : i32
    %c0_i32_1 = arith.constant 0 : i32
    return %c0_i32, %c0_i32_0 : i32, i32
  }
  func.func @transform_6(%arg0: i32) -> (i32, i32) {
    %c0_i32 = arith.constant 0 : i32
    %c0_i32_0 = arith.constant 0 : i32
    %c0_i32_1 = arith.constant 0 : i32
    return %c0_i32, %c0_i32_0 : i32, i32
  }
  func.func @transform_7(%arg0: i32) -> (i32, i32) {
    %c0_i32 = arith.constant 0 : i32
    %c0_i32_0 = arith.constant 0 : i32
    %c0_i32_1 = arith.constant 0 : i32
    return %c0_i32, %c0_i32_0 : i32, i32
  }
  func.func @transform_8(%arg0: i32) -> (i32, i32) {
    %c0_i32 = arith.constant 0 : i32
    %c0_i32_0 = arith.constant 0 : i32
    %c0_i32_1 = arith.constant 0 : i32
    return %c0_i32, %c0_i32_0 : i32, i32
  }
  func.func @transform_9(%arg0: i32) -> (i32, i32) {
    %c0_i32 = arith.constant 0 : i32
    %c0_i32_0 = arith.constant 0 : i32
    %c0_i32_1 = arith.constant 0 : i32
    return %c0_i32, %c0_i32_0 : i32, i32
  }
  func.func @transform_10(%arg0: i32) -> (i32, i32) {
    %c0_i32 = arith.constant 0 : i32
    %c0_i32_0 = arith.constant 0 : i32
    %c0_i32_1 = arith.constant 0 : i32
    return %c0_i32, %c0_i32_0 : i32, i32
  }
  func.func @transform_11(%arg0: i32) -> (i32, i32) {
    %c0_i32 = arith.constant 0 : i32
    %c0_i32_0 = arith.constant 0 : i32
    %c0_i32_1 = arith.constant 0 : i32
    return %c0_i32, %c0_i32_0 : i32, i32
  }
}

</mosaic_0001>

<llo_original>
// kernel: actor_critic_forward.1
$region0: #{actor_critic_forward.1}
  #allocation0 [shape = 'u32[]', space=smem, size = 0x4, offset = 0x4, fixed_abs, tag = 'smem constant byte address 0x4 - core index']
  #allocation1 [shape = 'u32[144,128]{1,0:T(1,128)}', space=vmem, size = 0x12000, scoped, tag = 'internal scratch']
  %s0 = inlined_call_operand.vmem [shape: bf16[128,256], index: 0, kind: input, shape index: {}]
  %s1 = inlined_call_operand.vmem [shape: bf16[256,32], index: 1, kind: input, shape index: {}]
  %s2 = inlined_call_operand.vmem [shape: f32[1,32], index: 2, kind: input, shape index: {}]
  %s3 = inlined_call_operand.vmem [shape: bf16[512,64], index: 3, kind: input, shape index: {}]
  %s4 = inlined_call_operand.vmem [shape: f32[1,64], index: 4, kind: input, shape index: {}]
  %s5 = inlined_call_operand.vmem [shape: bf16[576,64], index: 5, kind: input, shape index: {}]
  %s6 = inlined_call_operand.vmem [shape: f32[1,64], index: 6, kind: input, shape index: {}]
  %s7 = inlined_call_operand.vmem [shape: f32[64,512], index: 7, kind: input, shape index: {}]
  %s8 = inlined_call_operand.vmem [shape: f32[1,512], index: 8, kind: input, shape index: {}]
  %s9 = inlined_call_operand.vmem [shape: f32[512,128], index: 9, kind: input, shape index: {}]
  %s10 = inlined_call_operand.vmem [shape: f32[1,128], index: 10, kind: input, shape index: {}]
  %s11 = inlined_call_operand.vmem [shape: f32[2,128], index: 11, kind: output, shape index: {}]
  %s12 = sld [smem:[#allocation0]]
  $region54: #{actor_critic_forward.1} parent=0
    _
  %s14 = ssub.s32 1, %s12
  %s15 = scalar_select 0, %s14, %s12
  // Predicated region
  $region2: #{actor_critic_forward.1} parent=0 // pred_check
    _
  $region3: #{actor_critic_forward.1} parent=0 // pred_check_branch
    %17 = sbr.rel (0) target = $region5
  $region4: #{actor_critic_forward.1} parent=0 // pred_region
    _
  $region5: #{actor_critic_forward.1} parent=0 // pred_fallthru
    _
  // Predicated region
  $region6: #{actor_critic_forward.1} parent=0 // pred_check
    _
  $region7: #{actor_critic_forward.1} parent=0 // pred_check_branch
    %19 = sbr.rel (0) target = $region9
  $region8: #{actor_critic_forward.1} parent=0 // pred_region
    _
  $region9: #{actor_critic_forward.1} parent=0 // pred_fallthru
    _
  // Predicated region
  $region10: #{actor_critic_forward.1} parent=0 // pred_check
    _
  $region11: #{actor_critic_forward.1} parent=0 // pred_check_branch
    %21 = sbr.rel (0) target = $region13
  $region12: #{actor_critic_forward.1} parent=0 // pred_region
    _
  $region13: #{actor_critic_forward.1} parent=0 // pred_fallthru
    _
  // Predicated region
  $region14: #{actor_critic_forward.1} parent=0 // pred_check
    _
  $region15: #{actor_critic_forward.1} parent=0 // pred_check_branch
    %23 = sbr.rel (0) target = $region17
  $region16: #{actor_critic_forward.1} parent=0 // pred_region
    _
  $region17: #{actor_critic_forward.1} parent=0 // pred_fallthru
    _
  // Predicated region
  $region18: #{actor_critic_forward.1} parent=0 // pred_check
    _
  $region19: #{actor_critic_forward.1} parent=0 // pred_check_branch
    %25 = sbr.rel (0) target = $region21
  $region20: #{actor_critic_forward.1} parent=0 // pred_region
    _
  $region21: #{actor_critic_forward.1} parent=0 // pred_fallthru
    _
  // Predicated region
  $region22: #{actor_critic_forward.1} parent=0 // pred_check
    _
  $region23: #{actor_critic_forward.1} parent=0 // pred_check_branch
    %27 = sbr.rel (0) target = $region25
  $region24: #{actor_critic_forward.1} parent=0 // pred_region
    _
  $region25: #{actor_critic_forward.1} parent=0 // pred_fallthru
    _
  // Predicated region
  $region26: #{actor_critic_forward.1} parent=0 // pred_check
    _
  $region27: #{actor_critic_forward.1} parent=0 // pred_check_branch
    %29 = sbr.rel (0) target = $region29
  $region28: #{actor_critic_forward.1} parent=0 // pred_region
    _
  $region29: #{actor_critic_forward.1} parent=0 // pred_fallthru
    _
  // Predicated region
  $region30: #{actor_critic_forward.1} parent=0 // pred_check
    _
  $region31: #{actor_critic_forward.1} parent=0 // pred_check_branch
    %31 = sbr.rel (0) target = $region33
  $region32: #{actor_critic_forward.1} parent=0 // pred_region
    _
  $region33: #{actor_critic_forward.1} parent=0 // pred_fallthru
    _
  // Predicated region
  $region34: #{actor_critic_forward.1} parent=0 // pred_check
    _
  $region35: #{actor_critic_forward.1} parent=0 // pred_check_branch
    %33 = sbr.rel (0) target = $region37
  $region36: #{actor_critic_forward.1} parent=0 // pred_region
    _
  $region37: #{actor_critic_forward.1} parent=0 // pred_fallthru
    _
  // Predicated region
  $region38: #{actor_critic_forward.1} parent=0 // pred_check
    _
  $region39: #{actor_critic_forward.1} parent=0 // pred_check_branch
    %35 = sbr.rel (0) target = $region41
  $region40: #{actor_critic_forward.1} parent=0 // pred_region
    _
  $region41: #{actor_critic_forward.1} parent=0 // pred_fallthru
    _
  // Predicated region
  $region42: #{actor_critic_forward.1} parent=0 // pred_check
    _
  $region43: #{actor_critic_forward.1} parent=0 // pred_check_branch
    %37 = sbr.rel (0) target = $region45
  $region44: #{actor_critic_forward.1} parent=0 // pred_region
    _
  $region45: #{actor_critic_forward.1} parent=0 // pred_fallthru
    _
  %v39 = vld [vmem:[%s0] sm:$0xff]
  %v40 = vld [vmem:[%s0 + $0x8] sm:$0xff]
  %v41 = vld [vmem:[%s0 + $0x10] sm:$0xff]
  %v42 = vld [vmem:[%s0 + $0x18] sm:$0xff]
  %v43 = vld [vmem:[%s0 + $0x20] sm:$0xff]
  %v44 = vld [vmem:[%s0 + $0x28] sm:$0xff]
  %v45 = vld [vmem:[%s0 + $0x30] sm:$0xff]
  %v46 = vld [vmem:[%s0 + $0x38] sm:$0xff]
  %v47 = vld [vmem:[%s0 + $0x40] sm:$0xff]
  %v48 = vld [vmem:[%s0 + $0x48] sm:$0xff]
  %v49 = vld [vmem:[%s0 + $0x50] sm:$0xff]
  %v50 = vld [vmem:[%s0 + $0x58] sm:$0xff]
  %v51 = vld [vmem:[%s0 + $0x60] sm:$0xff]
  %v52 = vld [vmem:[%s0 + $0x68] sm:$0xff]
  %v53 = vld [vmem:[%s0 + $0x70] sm:$0xff]
  %v54 = vld [vmem:[%s0 + $0x78] sm:$0xff]
  %v55 = vld [vmem:[%s1] sm:$0xf]
  %v56 = vld [vmem:[%s1 + $0x4] sm:$0xf]
  %v57 = vld [vmem:[%s1 + $0x8] sm:$0xf]
  %v58 = vld [vmem:[%s1 + $0xc] sm:$0xf]
  %v59 = vld [vmem:[%s1 + $0x10] sm:$0xf]
  %v60 = vld [vmem:[%s1 + $0x14] sm:$0xf]
  %v61 = vld [vmem:[%s1 + $0x18] sm:$0xf]
  %v62 = vld [vmem:[%s1 + $0x1c] sm:$0xf]
  %v63 = vld [vmem:[%s1 + $0x20] sm:$0xf]
  %v64 = vld [vmem:[%s1 + $0x24] sm:$0xf]
  %v65 = vld [vmem:[%s1 + $0x28] sm:$0xf]
  %v66 = vld [vmem:[%s1 + $0x2c] sm:$0xf]
  %v67 = vld [vmem:[%s1 + $0x30] sm:$0xf]
  %v68 = vld [vmem:[%s1 + $0x34] sm:$0xf]
  %v69 = vld [vmem:[%s1 + $0x38] sm:$0xf]
  %v70 = vld [vmem:[%s1 + $0x3c] sm:$0xf]
  %v71 = vld [vmem:[%s1 + $0x40] sm:$0xf]
  %v72 = vld [vmem:[%s1 + $0x44] sm:$0xf]
  %v73 = vld [vmem:[%s1 + $0x48] sm:$0xf]
  %v74 = vld [vmem:[%s1 + $0x4c] sm:$0xf]
  %v75 = vld [vmem:[%s1 + $0x50] sm:$0xf]
  %v76 = vld [vmem:[%s1 + $0x54] sm:$0xf]
  %v77 = vld [vmem:[%s1 + $0x58] sm:$0xf]
  %v78 = vld [vmem:[%s1 + $0x5c] sm:$0xf]
  %v79 = vld [vmem:[%s1 + $0x60] sm:$0xf]
  %v80 = vld [vmem:[%s1 + $0x64] sm:$0xf]
  %v81 = vld [vmem:[%s1 + $0x68] sm:$0xf]
  %v82 = vld [vmem:[%s1 + $0x6c] sm:$0xf]
  %v83 = vld [vmem:[%s1 + $0x70] sm:$0xf]
  %v84 = vld [vmem:[%s1 + $0x74] sm:$0xf]
  %v85 = vld [vmem:[%s1 + $0x78] sm:$0xf]
  %v86 = vld [vmem:[%s1 + $0x7c] sm:$0xf]
  %v87 = vld [vmem:[%s2] sm:$0x1]
  %v89 = vlaneseq
  %v90 = vshrl.u32 %v89, 7
  %v91 = vsub.s32 0, %v90
  %v92 = vrot.slane %v87, %v91
  %v110 = vunpack.c.l.b16 %v39
  %v111 = vunpack.c.h.b16 %v39
  %v112 = vunpack.c.l.b16 %v40
  %v113 = vunpack.c.h.b16 %v40
  %v114 = vunpack.c.l.b16 %v41
  %v115 = vunpack.c.h.b16 %v41
  %v116 = vunpack.c.l.b16 %v42
  %v117 = vunpack.c.h.b16 %v42
  %v118 = vunpack.c.l.b16 %v43
  %v119 = vunpack.c.h.b16 %v43
  %v120 = vunpack.c.l.b16 %v44
  %v121 = vunpack.c.h.b16 %v44
  %v122 = vunpack.c.l.b16 %v45
  %v123 = vunpack.c.h.b16 %v45
  %v124 = vunpack.c.l.b16 %v46
  %v125 = vunpack.c.h.b16 %v46
  %v126 = vunpack.c.l.b16 %v47
  %v127 = vunpack.c.h.b16 %v47
  %v128 = vunpack.c.l.b16 %v48
  %v129 = vunpack.c.h.b16 %v48
  %v130 = vunpack.c.l.b16 %v49
  %v131 = vunpack.c.h.b16 %v49
  %v132 = vunpack.c.l.b16 %v50
  %v133 = vunpack.c.h.b16 %v50
  %v134 = vunpack.c.l.b16 %v51
  %v135 = vunpack.c.h.b16 %v51
  %v136 = vunpack.c.l.b16 %v52
  %v137 = vunpack.c.h.b16 %v52
  %v138 = vunpack.c.l.b16 %v53
  %v139 = vunpack.c.h.b16 %v53
  %v140 = vunpack.c.l.b16 %v54
  %v141 = vunpack.c.h.b16 %v54
  %v142 = vpack.c.b16 %v112, %v110
  %v143 = vpack.c.b16 %v113, %v111
  %v144 = vpack.c.b16 %v116, %v114
  %v145 = vpack.c.b16 %v117, %v115
  %v146 = vpack.c.b16 %v120, %v118
  %v147 = vpack.c.b16 %v121, %v119
  %v148 = vpack.c.b16 %v124, %v122
  %v149 = vpack.c.b16 %v125, %v123
  %v150 = vpack.c.b16 %v128, %v126
  %v151 = vpack.c.b16 %v129, %v127
  %v152 = vpack.c.b16 %v132, %v130
  %v153 = vpack.c.b16 %v133, %v131
  %v154 = vpack.c.b16 %v136, %v134
  %v155 = vpack.c.b16 %v137, %v135
  %v156 = vpack.c.b16 %v140, %v138
  %v157 = vpack.c.b16 %v141, %v139
  %v206 = vunpack.c.l.b16 %v55
  %v207 = vunpack.c.l.b16 %v56
  %v208 = vunpack.c.l.b16 %v57
  %v209 = vunpack.c.l.b16 %v58
  %v210 = vunpack.c.l.b16 %v59
  %v211 = vunpack.c.l.b16 %v60
  %v212 = vunpack.c.l.b16 %v61
  %v213 = vunpack.c.l.b16 %v62
  %v214 = vunpack.c.l.b16 %v63
  %v215 = vunpack.c.l.b16 %v64
  %v216 = vunpack.c.l.b16 %v65
  %v217 = vunpack.c.l.b16 %v66
  %v218 = vunpack.c.l.b16 %v67
  %v219 = vunpack.c.l.b16 %v68
  %v220 = vunpack.c.l.b16 %v69
  %v221 = vunpack.c.l.b16 %v70
  %v222 = vunpack.c.l.b16 %v71
  %v223 = vunpack.c.l.b16 %v72
  %v224 = vunpack.c.l.b16 %v73
  %v225 = vunpack.c.l.b16 %v74
  %v226 = vunpack.c.l.b16 %v75
  %v227 = vunpack.c.l.b16 %v76
  %v228 = vunpack.c.l.b16 %v77
  %v229 = vunpack.c.l.b16 %v78
  %v230 = vunpack.c.l.b16 %v79
  %v231 = vunpack.c.l.b16 %v80
  %v232 = vunpack.c.l.b16 %v81
  %v233 = vunpack.c.l.b16 %v82
  %v234 = vunpack.c.l.b16 %v83
  %v235 = vunpack.c.l.b16 %v84
  %v236 = vunpack.c.l.b16 %v85
  %v237 = vunpack.c.l.b16 %v86
  %v238 = vpack.c.b16 %v207, %v206
  %v239 = vpack.c.b16 %v209, %v208
  %v240 = vpack.c.b16 %v211, %v210
  %v241 = vpack.c.b16 %v213, %v212
  %v242 = vpack.c.b16 %v215, %v214
  %v243 = vpack.c.b16 %v217, %v216
  %v244 = vpack.c.b16 %v219, %v218
  %v245 = vpack.c.b16 %v221, %v220
  %v246 = vpack.c.b16 %v223, %v222
  %v247 = vpack.c.b16 %v225, %v224
  %v248 = vpack.c.b16 %v227, %v226
  %v249 = vpack.c.b16 %v229, %v228
  %v250 = vpack.c.b16 %v231, %v230
  %v251 = vpack.c.b16 %v233, %v232
  %v252 = vpack.c.b16 %v235, %v234
  %v253 = vpack.c.b16 %v237, %v236
  %270 = vmatprep.subr.bf16.mxu0 0
  %271 = vmatpush1.bf16.msra.mxu0 %v245
  %272 = vmatprep.subr.bf16.mxu0 0
  %273 = vmatpush1.bf16.msra.mxu0 %v244
  %274 = vmatprep.subr.bf16.mxu0 0
  %275 = vmatpush1.bf16.msra.mxu0 %v243
  %276 = vmatprep.subr.bf16.mxu0 0
  %277 = vmatpush1.bf16.msra.mxu0 %v242
  %278 = vmatprep.subr.bf16.mxu0 0
  %279 = vmatpush1.bf16.msra.mxu0 %v241
  %280 = vmatprep.subr.bf16.mxu0 0
  %281 = vmatpush1.bf16.msra.mxu0 %v240
  %282 = vmatprep.subr.bf16.mxu0 0
  %283 = vmatpush1.bf16.msra.mxu0 %v239
  %284 = vmatprep.subr.bf16.mxu0 0
  %285 = vmatpush1.bf16.msra.mxu0 %v238
  %286 = vmatprep.subr.bf16.mxu0 0
  %287 = vmatpush2.bf16.msra.mxu0 %v253
  %288 = vmatprep.subr.bf16.mxu0 0
  %289 = vmatpush2.bf16.msra.mxu0 %v252
  %290 = vmatprep.subr.bf16.mxu0 0
  %291 = vmatpush2.bf16.msra.mxu0 %v251
  %292 = vmatprep.subr.bf16.mxu0 0
  %293 = vmatpush2.bf16.msra.mxu0 %v250
  %294 = vmatprep.subr.bf16.mxu0 0
  %295 = vmatpush2.bf16.msra.mxu0 %v249
  %296 = vmatprep.subr.bf16.mxu0 0
  %297 = vmatpush2.bf16.msra.mxu0 %v248
  %298 = vmatprep.subr.bf16.mxu0 0
  %299 = vmatpush2.bf16.msra.mxu0 %v247
  %300 = vmatprep.subr.bf16.mxu0 0
  %301 = vmatpush2.bf16.msra.mxu0 %v246
  %302 = vmatprep.mubr.bf16.mxu0 %v143
  %303 = vmatmul.mubr.bf16.gmra.mxu0 %v142
  %v304 = vpop.f32.mrf.mxu0
  %v305 = vadd.f32 %v92, %v304
  %v306 = vpop.f32.mrf.mxu0
  %v307 = vpop.f32.mrf.mxu0
  %v308 = vadd.f32 %v92, %v307
  %v309 = vpop.f32.mrf.mxu0
  %310 = vmatprep.mubr.bf16.mxu0 %v145
  %311 = vmatmul.mubr.bf16.gmra.mxu0 %v144
  %v312 = vpop.f32.mrf.mxu0
  %v313 = vadd.f32 %v92, %v312
  %v314 = vpop.f32.mrf.mxu0
  %v315 = vpop.f32.mrf.mxu0
  %v316 = vadd.f32 %v92, %v315
  %v317 = vpop.f32.mrf.mxu0
  %318 = vmatprep.mubr.bf16.mxu0 %v147
  %319 = vmatmul.mubr.bf16.gmra.mxu0 %v146
  %v320 = vpop.f32.mrf.mxu0
  %v321 = vadd.f32 %v92, %v320
  %v322 = vpop.f32.mrf.mxu0
  %v323 = vpop.f32.mrf.mxu0
  %v324 = vadd.f32 %v92, %v323
  %v325 = vpop.f32.mrf.mxu0
  %326 = vmatprep.mubr.bf16.mxu0 %v149
  %327 = vmatmul.mubr.bf16.gmra.mxu0 %v148
  %v328 = vpop.f32.mrf.mxu0
  %v329 = vadd.f32 %v92, %v328
  %v330 = vpop.f32.mrf.mxu0
  %v331 = vpop.f32.mrf.mxu0
  %v332 = vadd.f32 %v92, %v331
  %v333 = vpop.f32.mrf.mxu0
  %334 = vmatprep.mubr.bf16.mxu0 %v151
  %335 = vmatmul.mubr.bf16.gmra.mxu0 %v150
  %v336 = vpop.f32.mrf.mxu0
  %v337 = vadd.f32 %v92, %v336
  %v338 = vpop.f32.mrf.mxu0
  %v339 = vpop.f32.mrf.mxu0
  %v340 = vadd.f32 %v92, %v339
  %v341 = vpop.f32.mrf.mxu0
  %342 = vmatprep.mubr.bf16.mxu0 %v153
  %343 = vmatmul.mubr.bf16.gmra.mxu0 %v152
  %v344 = vpop.f32.mrf.mxu0
  %v345 = vadd.f32 %v92, %v344
  %v346 = vpop.f32.mrf.mxu0
  %v347 = vpop.f32.mrf.mxu0
  %v348 = vadd.f32 %v92, %v347
  %v349 = vpop.f32.mrf.mxu0
  %350 = vmatprep.mubr.bf16.mxu0 %v155
  %351 = vmatmul.mubr.bf16.gmra.mxu0 %v154
  %v352 = vpop.f32.mrf.mxu0
  %v353 = vadd.f32 %v92, %v352
  %v354 = vpop.f32.mrf.mxu0
  %v355 = vpop.f32.mrf.mxu0
  %v356 = vadd.f32 %v92, %v355
  %v357 = vpop.f32.mrf.mxu0
  %358 = vmatprep.mubr.bf16.mxu0 %v157
  %359 = vmatmul.mubr.bf16.gmra.mxu0 %v156
  %v360 = vpop.f32.mrf.mxu0
  %v361 = vadd.f32 %v92, %v360
  %v362 = vpop.f32.mrf.mxu0
  %v363 = vpop.f32.mrf.mxu0
  %v364 = vadd.f32 %v92, %v363
  %v365 = vpop.f32.mrf.mxu0
  %366 = vdwg.mxu0
  %v367 = vmax.f32 %v305, 0.0
  %v368 = vmax.f32 %v308, 0.0
  %v369 = vmax.f32 %v313, 0.0
  %v370 = vmax.f32 %v316, 0.0
  %v371 = vmax.f32 %v321, 0.0
  %v372 = vmax.f32 %v324, 0.0
  %v373 = vmax.f32 %v329, 0.0
  %v374 = vmax.f32 %v332, 0.0
  %v375 = vmax.f32 %v337, 0.0
  %v376 = vmax.f32 %v340, 0.0
  %v377 = vmax.f32 %v345, 0.0
  %v378 = vmax.f32 %v348, 0.0
  %v379 = vmax.f32 %v353, 0.0
  %v380 = vmax.f32 %v356, 0.0
  %v381 = vmax.f32 %v361, 0.0
  %v382 = vmax.f32 %v364, 0.0
  %vm399 = vcmask 1046528
  %v400 = vrot.slane %v367, 1
  %v401 = vrot.slane %v368, 1
  %v402 = vsel %vm399, %v400, %v401
  %v403 = vrot.slane %v369, 1
  %v404 = vsel %vm399, %v401, %v403
  %v405 = vrot.slane %v370, 1
  %v406 = vsel %vm399, %v403, %v405
  %v407 = vrot.slane %v371, 1
  %v408 = vsel %vm399, %v405, %v407
  %v409 = vrot.slane %v372, 1
  %v410 = vsel %vm399, %v407, %v409
  %v411 = vrot.slane %v373, 1
  %v412 = vsel %vm399, %v409, %v411
  %v413 = vrot.slane %v374, 1
  %v414 = vsel %vm399, %v411, %v413
  %v415 = vrot.slane %v375, 1
  %v416 = vsel %vm399, %v413, %v415
  %v417 = vrot.slane %v376, 1
  %v418 = vsel %vm399, %v415, %v417
  %v419 = vrot.slane %v377, 1
  %v420 = vsel %vm399, %v417, %v419
  %v421 = vrot.slane %v378, 1
  %v422 = vsel %vm399, %v419, %v421
  %v423 = vrot.slane %v379, 1
  %v424 = vsel %vm399, %v421, %v423
  %v425 = vrot.slane %v380, 1
  %v426 = vsel %vm399, %v423, %v425
  %v427 = vrot.slane %v381, 1
  %v428 = vsel %vm399, %v425, %v427
  %v429 = vrot.slane %v382, 1
  %v430 = vsel %vm399, %v427, %v429
  %v433 = vsel %vm399, %v429, %v400
  %vm434 = vcmask 1043456
  %v435 = vrot.slane %v367, 4
  %v436 = vrot.slane %v368, 4
  %v437 = vsel %vm434, %v435, %v436
  %v438 = vrot.slane %v369, 4
  %v439 = vsel %vm434, %v436, %v438
  %v440 = vrot.slane %v370, 4
  %v441 = vsel %vm434, %v438, %v440
  %v442 = vrot.slane %v371, 4
  %v443 = vsel %vm434, %v440, %v442
  %v444 = vrot.slane %v372, 4
  %v445 = vsel %vm434, %v442, %v444
  %v446 = vrot.slane %v373, 4
  %v447 = vsel %vm434, %v444, %v446
  %v448 = vrot.slane %v374, 4
  %v449 = vsel %vm434, %v446, %v448
  %v450 = vrot.slane %v375, 4
  %v451 = vsel %vm434, %v448, %v450
  %v452 = vrot.slane %v376, 4
  %v453 = vsel %vm434, %v450, %v452
  %v454 = vrot.slane %v377, 4
  %v455 = vsel %vm434, %v452, %v454
  %v456 = vrot.slane %v378, 4
  %v457 = vsel %vm434, %v454, %v456
  %v458 = vrot.slane %v379, 4
  %v459 = vsel %vm434, %v456, %v458
  %v460 = vrot.slane %v380, 4
  %v461 = vsel %vm434, %v458, %v460
  %v462 = vrot.slane %v381, 4
  %v463 = vsel %vm434, %v460, %v462
  %v464 = vrot.slane %v382, 4
  %v465 = vsel %vm434, %v462, %v464
  %v476 = vsel %vm434, %v464, %v435
  %vm477 = vcmask 1042432
  %v478 = vrot.slane %v367, 5
  %v479 = vrot.slane %v368, 5
  %v480 = vsel %vm477, %v478, %v479
  %v481 = vrot.slane %v369, 5
  %v482 = vsel %vm477, %v479, %v481
  %v483 = vrot.slane %v370, 5
  %v484 = vsel %vm477, %v481, %v483
  %v485 = vrot.slane %v371, 5
  %v486 = vsel %vm477, %v483, %v485
  %v487 = vrot.slane %v372, 5
  %v488 = vsel %vm477, %v485, %v487
  %v489 = vrot.slane %v373, 5
  %v490 = vsel %vm477, %v487, %v489
  %v491 = vrot.slane %v374, 5
  %v492 = vsel %vm477, %v489, %v491
  %v493 = vrot.slane %v375, 5
  %v494 = vsel %vm477, %v491, %v493
  %v495 = vrot.slane %v376, 5
  %v496 = vsel %vm477, %v493, %v495
  %v497 = vrot.slane %v377, 5
  %v498 = vsel %vm477, %v495, %v497
  %v499 = vrot.slane %v378, 5
  %v500 = vsel %vm477, %v497, %v499
  %v501 = vrot.slane %v379, 5
  %v502 = vsel %vm477, %v499, %v501
  %v503 = vrot.slane %v380, 5
  %v504 = vsel %vm477, %v501, %v503
  %v505 = vrot.slane %v381, 5
  %v506 = vsel %vm477, %v503, %v505
  %v507 = vrot.slane %v382, 5
  %v508 = vsel %vm477, %v505, %v507
  %v511 = vsel %vm477, %v507, %v478
  %512 = vrot.lane.b32.xlu0 %v371, 32
  %v513 = vpop.permute.xlu0 %512
  %514 = vrot.lane.b32.xlu0 %v372, 32
  %v515 = vpop.permute.xlu0 %514
  %516 = vrot.lane.b32.xlu0 %v373, 32
  %v517 = vpop.permute.xlu0 %516
  %518 = vrot.lane.b32.xlu0 %v374, 32
  %v519 = vpop.permute.xlu0 %518
  %524 = vrot.lane.b32.xlu0 %v402, 64
  %v525 = vpop.permute.xlu0 %524
  %526 = vrot.lane.b32.xlu0 %v404, 64
  %v527 = vpop.permute.xlu0 %526
  %528 = vrot.lane.b32.xlu0 %v406, 64
  %v529 = vpop.permute.xlu0 %528
  %530 = vrot.lane.b32.xlu0 %v408, 64
  %v531 = vpop.permute.xlu0 %530
  %536 = vrot.lane.b32.xlu0 %v410, 96
  %v537 = vpop.permute.xlu0 %536
  %538 = vrot.lane.b32.xlu0 %v412, 96
  %v539 = vpop.permute.xlu0 %538
  %540 = vrot.lane.b32.xlu0 %v414, 96
  %v541 = vpop.permute.xlu0 %540
  %542 = vrot.lane.b32.xlu0 %v416, 96
  %v543 = vpop.permute.xlu0 %542
  %548 = vrot.lane.b32.xlu0 %v379, 32
  %v549 = vpop.permute.xlu0 %548
  %550 = vrot.lane.b32.xlu0 %v380, 32
  %v551 = vpop.permute.xlu0 %550
  %552 = vrot.lane.b32.xlu0 %v381, 32
  %v553 = vpop.permute.xlu0 %552
  %554 = vrot.lane.b32.xlu0 %v382, 32
  %v555 = vpop.permute.xlu0 %554
  %560 = vrot.lane.b32.xlu0 %v418, 64
  %v561 = vpop.permute.xlu0 %560
  %562 = vrot.lane.b32.xlu0 %v420, 64
  %v563 = vpop.permute.xlu0 %562
  %564 = vrot.lane.b32.xlu0 %v422, 64
  %v565 = vpop.permute.xlu0 %564
  %566 = vrot.lane.b32.xlu0 %v424, 64
  %v567 = vpop.permute.xlu0 %566
  %573 = vrot.lane.b32.xlu0 %v426, 96
  %v574 = vpop.permute.xlu0 %573
  %575 = vrot.lane.b32.xlu0 %v428, 96
  %v576 = vpop.permute.xlu0 %575
  %577 = vrot.lane.b32.xlu0 %v430, 96
  %v578 = vpop.permute.xlu0 %577
  %579 = vrot.lane.b32.xlu0 %v433, 96
  %v580 = vpop.permute.xlu0 %579
  %585 = vrot.lane.b32.xlu0 %v445, 32
  %v586 = vpop.permute.xlu0 %585
  %587 = vrot.lane.b32.xlu0 %v447, 32
  %v588 = vpop.permute.xlu0 %587
  %589 = vrot.lane.b32.xlu0 %v449, 32
  %v590 = vpop.permute.xlu0 %589
  %591 = vrot.lane.b32.xlu0 %v451, 32
  %v592 = vpop.permute.xlu0 %591
  %597 = vrot.lane.b32.xlu0 %v480, 64
  %v598 = vpop.permute.xlu0 %597
  %599 = vrot.lane.b32.xlu0 %v482, 64
  %v600 = vpop.permute.xlu0 %599
  %601 = vrot.lane.b32.xlu0 %v484, 64
  %v602 = vpop.permute.xlu0 %601
  %603 = vrot.lane.b32.xlu0 %v486, 64
  %v604 = vpop.permute.xlu0 %603
  %609 = vrot.lane.b32.xlu0 %v488, 96
  %v610 = vpop.permute.xlu0 %609
  %611 = vrot.lane.b32.xlu0 %v490, 96
  %v612 = vpop.permute.xlu0 %611
  %613 = vrot.lane.b32.xlu0 %v492, 96
  %v614 = vpop.permute.xlu0 %613
  %615 = vrot.lane.b32.xlu0 %v494, 96
  %v616 = vpop.permute.xlu0 %615
  %622 = vrot.lane.b32.xlu0 %v461, 32
  %v623 = vpop.permute.xlu0 %622
  %624 = vrot.lane.b32.xlu0 %v463, 32
  %v625 = vpop.permute.xlu0 %624
  %626 = vrot.lane.b32.xlu0 %v465, 32
  %v627 = vpop.permute.xlu0 %626
  %628 = vrot.lane.b32.xlu0 %v476, 32
  %v629 = vpop.permute.xlu0 %628
  %634 = vrot.lane.b32.xlu0 %v496, 64
  %v635 = vpop.permute.xlu0 %634
  %636 = vrot.lane.b32.xlu0 %v498, 64
  %v637 = vpop.permute.xlu0 %636
  %638 = vrot.lane.b32.xlu0 %v500, 64
  %v639 = vpop.permute.xlu0 %638
  %640 = vrot.lane.b32.xlu0 %v502, 64
  %v641 = vpop.permute.xlu0 %640
  %647 = vrot.lane.b32.xlu0 %v504, 96
  %v648 = vpop.permute.xlu0 %647
  %649 = vrot.lane.b32.xlu0 %v506, 96
  %v650 = vpop.permute.xlu0 %649
  %651 = vrot.lane.b32.xlu0 %v508, 96
  %v652 = vpop.permute.xlu0 %651
  %653 = vrot.lane.b32.xlu0 %v511, 96
  %v654 = vpop.permute.xlu0 %653
  %vm659 = vcmask 261120
  %v660 = vsel %vm659, %v367, %v513
  %v661 = vsel %vm659, %v368, %v515
  %v662 = vsel %vm659, %v369, %v517
  %v663 = vsel %vm659, %v370, %v519
  %vm664 = vcmask 523264
  %v665 = vsel %vm664, %v660, %v525
  %v666 = vsel %vm664, %v661, %v527
  %v667 = vsel %vm664, %v662, %v529
  %v668 = vsel %vm664, %v663, %v531
  %vm669 = vcmask 785408
  %v670 = vsel %vm669, %v665, %v537
  %v671 = vsel %vm669, %v666, %v539
  %v672 = vsel %vm669, %v667, %v541
  %v673 = vsel %vm669, %v668, %v543
  %v674 = vsel %vm659, %v375, %v549
  %v675 = vsel %vm659, %v376, %v551
  %v676 = vsel %vm659, %v377, %v553
  %v677 = vsel %vm659, %v378, %v555
  %v678 = vsel %vm664, %v674, %v561
  %v679 = vsel %vm664, %v675, %v563
  %v680 = vsel %vm664, %v676, %v565
  %v681 = vsel %vm664, %v677, %v567
  %v682 = vsel %vm669, %v678, %v574
  %v683 = vsel %vm669, %v679, %v576
  %v684 = vsel %vm669, %v680, %v578
  %v685 = vsel %vm669, %v681, %v580
  %v686 = vsel %vm659, %v437, %v586
  %v687 = vsel %vm659, %v439, %v588
  %v688 = vsel %vm659, %v441, %v590
  %v689 = vsel %vm659, %v443, %v592
  %v690 = vsel %vm664, %v686, %v598
  %v691 = vsel %vm664, %v687, %v600
  %v692 = vsel %vm664, %v688, %v602
  %v693 = vsel %vm664, %v689, %v604
  %v694 = vsel %vm669, %v690, %v610
  %v695 = vsel %vm669, %v691, %v612
  %v696 = vsel %vm669, %v692, %v614
  %v697 = vsel %vm669, %v693, %v616
  %v698 = vsel %vm659, %v453, %v623
  %v699 = vsel %vm659, %v455, %v625
  %v700 = vsel %vm659, %v457, %v627
  %v701 = vsel %vm659, %v459, %v629
  %v702 = vsel %vm664, %v698, %v635
  %v703 = vsel %vm664, %v699, %v637
  %v704 = vsel %vm664, %v700, %v639
  %v705 = vsel %vm664, %v701, %v641
  %v706 = vsel %vm669, %v702, %v648
  %v707 = vsel %vm669, %v703, %v650
  %v708 = vsel %vm669, %v704, %v652
  %v709 = vsel %vm669, %v705, %v654
  %v710 = vpack.c.bf16 %v671, %v670
  %v711 = vpack.c.bf16 %v683, %v682
  %v712 = vpack.c.bf16 %v695, %v694
  %v713 = vpack.c.bf16 %v707, %v706
  %v714 = vpack.c.bf16 %v673, %v672
  %v715 = vpack.c.bf16 %v685, %v684
  %v716 = vpack.c.bf16 %v697, %v696
  %v717 = vpack.c.bf16 %v709, %v708
  %v718 = vld [vmem:[%s3] sm:$0xf]
  %v719 = vld [vmem:[%s3 + $0x4] sm:$0xf]
  %v720 = vld [vmem:[%s3 + $0x8] sm:$0xf]
  %v721 = vld [vmem:[%s3 + $0xc] sm:$0xf]
  %v722 = vld [vmem:[%s3 + $0x10] sm:$0xf]
  %v723 = vld [vmem:[%s3 + $0x14] sm:$0xf]
  %v724 = vld [vmem:[%s3 + $0x18] sm:$0xf]
  %v725 = vld [vmem:[%s3 + $0x1c] sm:$0xf]
  %v726 = vld [vmem:[%s3 + $0x20] sm:$0xf]
  %v727 = vld [vmem:[%s3 + $0x24] sm:$0xf]
  %v728 = vld [vmem:[%s3 + $0x28] sm:$0xf]
  %v729 = vld [vmem:[%s3 + $0x2c] sm:$0xf]
  %v730 = vld [vmem:[%s3 + $0x30] sm:$0xf]
  %v731 = vld [vmem:[%s3 + $0x34] sm:$0xf]
  %v732 = vld [vmem:[%s3 + $0x38] sm:$0xf]
  %v733 = vld [vmem:[%s3 + $0x3c] sm:$0xf]
  %v734 = vld [vmem:[%s3 + $0x40] sm:$0xf]
  %v735 = vld [vmem:[%s3 + $0x44] sm:$0xf]
  %v736 = vld [vmem:[%s3 + $0x48] sm:$0xf]
  %v737 = vld [vmem:[%s3 + $0x4c] sm:$0xf]
  %v738 = vld [vmem:[%s3 + $0x50] sm:$0xf]
  %v739 = vld [vmem:[%s3 + $0x54] sm:$0xf]
  %v740 = vld [vmem:[%s3 + $0x58] sm:$0xf]
  %v741 = vld [vmem:[%s3 + $0x5c] sm:$0xf]
  %v742 = vld [vmem:[%s3 + $0x60] sm:$0xf]
  %v743 = vld [vmem:[%s3 + $0x64] sm:$0xf]
  %v744 = vld [vmem:[%s3 + $0x68] sm:$0xf]
  %v745 = vld [vmem:[%s3 + $0x6c] sm:$0xf]
  %v746 = vld [vmem:[%s3 + $0x70] sm:$0xf]
  %v747 = vld [vmem:[%s3 + $0x74] sm:$0xf]
  %v748 = vld [vmem:[%s3 + $0x78] sm:$0xf]
  %v749 = vld [vmem:[%s3 + $0x7c] sm:$0xf]
  %v750 = vld [vmem:[%s3 + $0x80] sm:$0xf]
  %v751 = vld [vmem:[%s3 + $0x84] sm:$0xf]
  %v752 = vld [vmem:[%s3 + $0x88] sm:$0xf]
  %v753 = vld [vmem:[%s3 + $0x8c] sm:$0xf]
  %v754 = vld [vmem:[%s3 + $0x90] sm:$0xf]
  %v755 = vld [vmem:[%s3 + $0x94] sm:$0xf]
  %v756 = vld [vmem:[%s3 + $0x98] sm:$0xf]
  %v757 = vld [vmem:[%s3 + $0x9c] sm:$0xf]
  %v758 = vld [vmem:[%s3 + $0xa0] sm:$0xf]
  %v759 = vld [vmem:[%s3 + $0xa4] sm:$0xf]
  %v760 = vld [vmem:[%s3 + $0xa8] sm:$0xf]
  %v761 = vld [vmem:[%s3 + $0xac] sm:$0xf]
  %v762 = vld [vmem:[%s3 + $0xb0] sm:$0xf]
  %v763 = vld [vmem:[%s3 + $0xb4] sm:$0xf]
  %v764 = vld [vmem:[%s3 + $0xb8] sm:$0xf]
  %v765 = vld [vmem:[%s3 + $0xbc] sm:$0xf]
  %v766 = vld [vmem:[%s3 + $0xc0] sm:$0xf]
  %v767 = vld [vmem:[%s3 + $0xc4] sm:$0xf]
  %v768 = vld [vmem:[%s3 + $0xc8] sm:$0xf]
  %v769 = vld [vmem:[%s3 + $0xcc] sm:$0xf]
  %v770 = vld [vmem:[%s3 + $0xd0] sm:$0xf]
  %v771 = vld [vmem:[%s3 + $0xd4] sm:$0xf]
  %v772 = vld [vmem:[%s3 + $0xd8] sm:$0xf]
  %v773 = vld [vmem:[%s3 + $0xdc] sm:$0xf]
  %v774 = vld [vmem:[%s3 + $0xe0] sm:$0xf]
  %v775 = vld [vmem:[%s3 + $0xe4] sm:$0xf]
  %v776 = vld [vmem:[%s3 + $0xe8] sm:$0xf]
  %v777 = vld [vmem:[%s3 + $0xec] sm:$0xf]
  %v778 = vld [vmem:[%s3 + $0xf0] sm:$0xf]
  %v779 = vld [vmem:[%s3 + $0xf4] sm:$0xf]
  %v780 = vld [vmem:[%s3 + $0xf8] sm:$0xf]
  %v781 = vld [vmem:[%s3 + $0xfc] sm:$0xf]
  %v782 = vld [vmem:[%s4] sm:$0x1]
  %v784 = vlaneseq
  %v785 = vshrl.u32 %v784, 7
  %v786 = vsub.s32 0, %v785
  %v787 = vrot.slane %v782, %v786
  %v853 = vunpack.c.l.b16 %v718
  %v854 = vunpack.c.l.b16 %v719
  %v855 = vunpack.c.l.b16 %v720
  %v856 = vunpack.c.l.b16 %v721
  %v857 = vunpack.c.l.b16 %v722
  %v858 = vunpack.c.l.b16 %v723
  %v859 = vunpack.c.l.b16 %v724
  %v860 = vunpack.c.l.b16 %v725
  %v861 = vunpack.c.l.b16 %v726
  %v862 = vunpack.c.l.b16 %v727
  %v863 = vunpack.c.l.b16 %v728
  %v864 = vunpack.c.l.b16 %v729
  %v865 = vunpack.c.l.b16 %v730
  %v866 = vunpack.c.l.b16 %v731
  %v867 = vunpack.c.l.b16 %v732
  %v868 = vunpack.c.l.b16 %v733
  %v869 = vunpack.c.l.b16 %v734
  %v870 = vunpack.c.l.b16 %v735
  %v871 = vunpack.c.l.b16 %v736
  %v872 = vunpack.c.l.b16 %v737
  %v873 = vunpack.c.l.b16 %v738
  %v874 = vunpack.c.l.b16 %v739
  %v875 = vunpack.c.l.b16 %v740
  %v876 = vunpack.c.l.b16 %v741
  %v877 = vunpack.c.l.b16 %v742
  %v878 = vunpack.c.l.b16 %v743
  %v879 = vunpack.c.l.b16 %v744
  %v880 = vunpack.c.l.b16 %v745
  %v881 = vunpack.c.l.b16 %v746
  %v882 = vunpack.c.l.b16 %v747
  %v883 = vunpack.c.l.b16 %v748
  %v884 = vunpack.c.l.b16 %v749
  %v885 = vunpack.c.l.b16 %v750
  %v886 = vunpack.c.l.b16 %v751
  %v887 = vunpack.c.l.b16 %v752
  %v888 = vunpack.c.l.b16 %v753
  %v889 = vunpack.c.l.b16 %v754
  %v890 = vunpack.c.l.b16 %v755
  %v891 = vunpack.c.l.b16 %v756
  %v892 = vunpack.c.l.b16 %v757
  %v893 = vunpack.c.l.b16 %v758
  %v894 = vunpack.c.l.b16 %v759
  %v895 = vunpack.c.l.b16 %v760
  %v896 = vunpack.c.l.b16 %v761
  %v897 = vunpack.c.l.b16 %v762
  %v898 = vunpack.c.l.b16 %v763
  %v899 = vunpack.c.l.b16 %v764
  %v900 = vunpack.c.l.b16 %v765
  %v901 = vunpack.c.l.b16 %v766
  %v902 = vunpack.c.l.b16 %v767
  %v903 = vunpack.c.l.b16 %v768
  %v904 = vunpack.c.l.b16 %v769
  %v905 = vunpack.c.l.b16 %v770
  %v906 = vunpack.c.l.b16 %v771
  %v907 = vunpack.c.l.b16 %v772
  %v908 = vunpack.c.l.b16 %v773
  %v909 = vunpack.c.l.b16 %v774
  %v910 = vunpack.c.l.b16 %v775
  %v911 = vunpack.c.l.b16 %v776
  %v912 = vunpack.c.l.b16 %v777
  %v913 = vunpack.c.l.b16 %v778
  %v914 = vunpack.c.l.b16 %v779
  %v915 = vunpack.c.l.b16 %v780
  %v916 = vunpack.c.l.b16 %v781
  %v917 = vpack.c.b16 %v854, %v853
  %v918 = vpack.c.b16 %v856, %v855
  %v919 = vpack.c.b16 %v858, %v857
  %v920 = vpack.c.b16 %v860, %v859
  %v921 = vpack.c.b16 %v862, %v861
  %v922 = vpack.c.b16 %v864, %v863
  %v923 = vpack.c.b16 %v866, %v865
  %v924 = vpack.c.b16 %v868, %v867
  %v925 = vpack.c.b16 %v870, %v869
  %v926 = vpack.c.b16 %v872, %v871
  %v927 = vpack.c.b16 %v874, %v873
  %v928 = vpack.c.b16 %v876, %v875
  %v929 = vpack.c.b16 %v878, %v877
  %v930 = vpack.c.b16 %v880, %v879
  %v931 = vpack.c.b16 %v882, %v881
  %v932 = vpack.c.b16 %v884, %v883
  %v933 = vpack.c.b16 %v886, %v885
  %v934 = vpack.c.b16 %v888, %v887
  %v935 = vpack.c.b16 %v890, %v889
  %v936 = vpack.c.b16 %v892, %v891
  %v937 = vpack.c.b16 %v894, %v893
  %v938 = vpack.c.b16 %v896, %v895
  %v939 = vpack.c.b16 %v898, %v897
  %v940 = vpack.c.b16 %v900, %v899
  %v941 = vpack.c.b16 %v902, %v901
  %v942 = vpack.c.b16 %v904, %v903
  %v943 = vpack.c.b16 %v906, %v905
  %v944 = vpack.c.b16 %v908, %v907
  %v945 = vpack.c.b16 %v910, %v909
  %v946 = vpack.c.b16 %v912, %v911
  %v947 = vpack.c.b16 %v914, %v913
  %v948 = vpack.c.b16 %v916, %v915
  %981 = vmatprep.subr.bf16.mxu0 0
  %982 = vmatpush1.bf16.msra.mxu0 %v924
  %983 = vmatprep.subr.bf16.mxu0 0
  %984 = vmatpush1.bf16.msra.mxu0 %v923
  %985 = vmatprep.subr.bf16.mxu0 0
  %986 = vmatpush1.bf16.msra.mxu0 %v922
  %987 = vmatprep.subr.bf16.mxu0 0
  %988 = vmatpush1.bf16.msra.mxu0 %v921
  %989 = vmatprep.subr.bf16.mxu0 0
  %990 = vmatpush1.bf16.msra.mxu0 %v920
  %991 = vmatprep.subr.bf16.mxu0 0
  %992 = vmatpush1.bf16.msra.mxu0 %v919
  %993 = vmatprep.subr.bf16.mxu0 0
  %994 = vmatpush1.bf16.msra.mxu0 %v918
  %995 = vmatprep.subr.bf16.mxu0 0
  %996 = vmatpush1.bf16.msra.mxu0 %v917
  %997 = vmatprep.subr.bf16.mxu0 0
  %998 = vmatpush2.bf16.msra.mxu0 %v932
  %999 = vmatprep.subr.bf16.mxu0 0
  %1000 = vmatpush2.bf16.msra.mxu0 %v931
  %1001 = vmatprep.subr.bf16.mxu0 0
  %1002 = vmatpush2.bf16.msra.mxu0 %v930
  %1003 = vmatprep.subr.bf16.mxu0 0
  %1004 = vmatpush2.bf16.msra.mxu0 %v929
  %1005 = vmatprep.subr.bf16.mxu0 0
  %1006 = vmatpush2.bf16.msra.mxu0 %v928
  %1007 = vmatprep.subr.bf16.mxu0 0
  %1008 = vmatpush2.bf16.msra.mxu0 %v927
  %1009 = vmatprep.subr.bf16.mxu0 0
  %1010 = vmatpush2.bf16.msra.mxu0 %v926
  %1011 = vmatprep.subr.bf16.mxu0 0
  %1012 = vmatpush2.bf16.msra.mxu0 %v925
  %1013 = vmatprep.mubr.bf16.mxu0 %v711
  %1014 = vmatmul.mubr.bf16.gmra.mxu0 %v710
  %v1015 = vpop.f32.mrf.mxu0
  %v1016 = vadd.f32 %v787, %v1015
  %v1017 = vpop.f32.mrf.mxu0
  %v1018 = vpop.f32.mrf.mxu0
  %v1019 = vadd.f32 %v787, %v1018
  %v1020 = vpop.f32.mrf.mxu0
  %1021 = vmatprep.mubr.bf16.mxu0 %v715
  %1022 = vmatmul.mubr.bf16.gmra.mxu0 %v714
  %v1023 = vpop.f32.mrf.mxu0
  %v1024 = vadd.f32 %v787, %v1023
  %v1025 = vpop.f32.mrf.mxu0
  %v1026 = vpop.f32.mrf.mxu0
  %v1027 = vadd.f32 %v787, %v1026
  %v1028 = vpop.f32.mrf.mxu0
  %1029 = vdwg.mxu0
  %1030 = vmatprep.subr.bf16.mxu0 0
  %1031 = vmatpush1.bf16.msra.mxu0 %v940
  %1032 = vmatprep.subr.bf16.mxu0 0
  %1033 = vmatpush1.bf16.msra.mxu0 %v939
  %1034 = vmatprep.subr.bf16.mxu0 0
  %1035 = vmatpush1.bf16.msra.mxu0 %v938
  %1036 = vmatprep.subr.bf16.mxu0 0
  %1037 = vmatpush1.bf16.msra.mxu0 %v937
  %1038 = vmatprep.subr.bf16.mxu0 0
  %1039 = vmatpush1.bf16.msra.mxu0 %v936
  %1040 = vmatprep.subr.bf16.mxu0 0
  %1041 = vmatpush1.bf16.msra.mxu0 %v935
  %1042 = vmatprep.subr.bf16.mxu0 0
  %1043 = vmatpush1.bf16.msra.mxu0 %v934
  %1044 = vmatprep.subr.bf16.mxu0 0
  %1045 = vmatpush1.bf16.msra.mxu0 %v933
  %1046 = vmatprep.subr.bf16.mxu0 0
  %1047 = vmatpush2.bf16.msra.mxu0 %v948
  %1048 = vmatprep.subr.bf16.mxu0 0
  %1049 = vmatpush2.bf16.msra.mxu0 %v947
  %1050 = vmatprep.subr.bf16.mxu0 0
  %1051 = vmatpush2.bf16.msra.mxu0 %v946
  %1052 = vmatprep.subr.bf16.mxu0 0
  %1053 = vmatpush2.bf16.msra.mxu0 %v945
  %1054 = vmatprep.subr.bf16.mxu0 0
  %1055 = vmatpush2.bf16.msra.mxu0 %v944
  %1056 = vmatprep.subr.bf16.mxu0 0
  %1057 = vmatpush2.bf16.msra.mxu0 %v943
  %1058 = vmatprep.subr.bf16.mxu0 0
  %1059 = vmatpush2.bf16.msra.mxu0 %v942
  %1060 = vmatprep.subr.bf16.mxu0 0
  %1061 = vmatpush2.bf16.msra.mxu0 %v941
  %1062 = vmatprep.mubr.bf16.mxu0 %v713
  %1063 = vmatmul.mubr.bf16.gmra.mxu0 %v712
  %v1064 = vpop.f32.mrf.mxu0
  %v1065 = vadd.f32 %v1016, %v1064
  %v1066 = vpop.f32.mrf.mxu0
  %v1067 = vpop.f32.mrf.mxu0
  %v1068 = vadd.f32 %v1019, %v1067
  %v1069 = vpop.f32.mrf.mxu0
  %1070 = vmatprep.mubr.bf16.mxu0 %v717
  %1071 = vmatmul.mubr.bf16.gmra.mxu0 %v716
  %v1072 = vpop.f32.mrf.mxu0
  %v1073 = vadd.f32 %v1024, %v1072
  %v1074 = vpop.f32.mrf.mxu0
  %v1075 = vpop.f32.mrf.mxu0
  %v1076 = vadd.f32 %v1027, %v1075
  %v1077 = vpop.f32.mrf.mxu0
  %1078 = vdwg.mxu0
  %v1079 = vmax.f32 %v1065, 0.0
  %v1080 = vmax.f32 %v1068, 0.0
  %v1081 = vmax.f32 %v1073, 0.0
  %v1082 = vmax.f32 %v1076, 0.0
  %v1087 = vrot.slane %v1079, 1
  %v1088 = vrot.slane %v1080, 1
  %v1089 = vsel %vm399, %v1087, %v1088
  %v1090 = vrot.slane %v1081, 1
  %v1091 = vsel %vm399, %v1088, %v1090
  %v1092 = vrot.slane %v1082, 1
  %v1093 = vsel %vm399, %v1090, %v1092
  %v1096 = vsel %vm399, %v1092, %v1087
  %vm1097 = vcmask 1045504
  %v1098 = vrot.slane %v1079, 2
  %v1099 = vrot.slane %v1080, 2
  %v1100 = vsel %vm1097, %v1098, %v1099
  %v1101 = vrot.slane %v1081, 2
  %v1102 = vsel %vm1097, %v1099, %v1101
  %v1103 = vrot.slane %v1082, 2
  %v1104 = vsel %vm1097, %v1101, %v1103
  %v1110 = vsel %vm1097, %v1103, %v1098
  %v1111 = vrot.slane %v1079, 4
  %v1112 = vrot.slane %v1080, 4
  %v1113 = vsel %vm434, %v1111, %v1112
  %v1114 = vrot.slane %v1081, 4
  %v1115 = vsel %vm434, %v1112, %v1114
  %v1116 = vrot.slane %v1082, 4
  %v1117 = vsel %vm434, %v1114, %v1116
  %v1120 = vsel %vm434, %v1116, %v1111
  %v1121 = vrot.slane %v1079, 5
  %v1122 = vrot.slane %v1080, 5
  %v1123 = vsel %vm477, %v1121, %v1122
  %v1124 = vrot.slane %v1081, 5
  %v1125 = vsel %vm477, %v1122, %v1124
  %v1126 = vrot.slane %v1082, 5
  %v1127 = vsel %vm477, %v1124, %v1126
  %v1133 = vsel %vm477, %v1126, %v1121
  %vm1134 = vcmask 1041408
  %v1135 = vrot.slane %v1079, 6
  %v1136 = vrot.slane %v1080, 6
  %v1137 = vsel %vm1134, %v1135, %v1136
  %v1138 = vrot.slane %v1081, 6
  %v1139 = vsel %vm1134, %v1136, %v1138
  %v1140 = vrot.slane %v1082, 6
  %v1141 = vsel %vm1134, %v1138, %v1140
  %v1144 = vsel %vm1134, %v1140, %v1135
  %1146 = vrot.lane.b32.xlu0 %v1089, 64
  %v1147 = vpop.permute.xlu0 %1146
  %1148 = vrot.lane.b32.xlu0 %v1091, 64
  %v1149 = vpop.permute.xlu0 %1148
  %1150 = vrot.lane.b32.xlu0 %v1093, 64
  %v1151 = vpop.permute.xlu0 %1150
  %1152 = vrot.lane.b32.xlu0 %v1096, 64
  %v1153 = vpop.permute.xlu0 %1152
  %1159 = vrot.lane.b32.xlu0 %v1113, 64
  %v1160 = vpop.permute.xlu0 %1159
  %1161 = vrot.lane.b32.xlu0 %v1115, 64
  %v1162 = vpop.permute.xlu0 %1161
  %1163 = vrot.lane.b32.xlu0 %v1117, 64
  %v1164 = vpop.permute.xlu0 %1163
  %1165 = vrot.lane.b32.xlu0 %v1120, 64
  %v1166 = vpop.permute.xlu0 %1165
  %1172 = vrot.lane.b32.xlu0 %v1137, 64
  %v1173 = vpop.permute.xlu0 %1172
  %1174 = vrot.lane.b32.xlu0 %v1139, 64
  %v1175 = vpop.permute.xlu0 %1174
  %1176 = vrot.lane.b32.xlu0 %v1141, 64
  %v1177 = vpop.permute.xlu0 %1176
  %1178 = vrot.lane.b32.xlu0 %v1144, 64
  %v1179 = vpop.permute.xlu0 %1178
  %v1184 = vsel %vm664, %v1079, %v1147
  %v1185 = vsel %vm664, %v1080, %v1149
  %v1186 = vsel %vm664, %v1081, %v1151
  %v1187 = vsel %vm664, %v1082, %v1153
  %v1188 = vsel %vm664, %v1100, %v1160
  %v1189 = vsel %vm664, %v1102, %v1162
  %v1190 = vsel %vm664, %v1104, %v1164
  %v1191 = vsel %vm664, %v1110, %v1166
  %v1192 = vsel %vm664, %v1123, %v1173
  %v1193 = vsel %vm664, %v1125, %v1175
  %v1194 = vsel %vm664, %v1127, %v1177
  %v1195 = vsel %vm664, %v1133, %v1179
  %v1196 = vpack.c.bf16 %v1185, %v1184
  %v1197 = vpack.c.bf16 %v1189, %v1188
  %v1198 = vpack.c.bf16 %v1193, %v1192
  %v1199 = vpack.c.bf16 %v1186, %v1185
  %v1200 = vpack.c.bf16 %v1104, %v1102
  %v1201 = vpack.c.bf16 %v1187, %v1186
  %v1202 = vpack.c.bf16 %v1191, %v1190
  %v1203 = vpack.c.bf16 %v1195, %v1194
  %v1204 = vpack.c.bf16 %v1184, %v1187
  %v1205 = vpack.c.bf16 %v1100, %v1110
  %v1206 = vld [vmem:[%s5] sm:$0xf]
  %v1207 = vld [vmem:[%s5 + $0x4] sm:$0xf]
  %v1208 = vld [vmem:[%s5 + $0x8] sm:$0xf]
  %v1209 = vld [vmem:[%s5 + $0xc] sm:$0xf]
  %v1210 = vld [vmem:[%s5 + $0x10] sm:$0xf]
  %v1211 = vld [vmem:[%s5 + $0x14] sm:$0xf]
  %v1212 = vld [vmem:[%s5 + $0x18] sm:$0xf]
  %v1213 = vld [vmem:[%s5 + $0x1c] sm:$0xf]
  %v1214 = vld [vmem:[%s5 + $0x20] sm:$0xf]
  %v1215 = vld [vmem:[%s5 + $0x24] sm:$0xf]
  %v1216 = vld [vmem:[%s5 + $0x28] sm:$0xf]
  %v1217 = vld [vmem:[%s5 + $0x2c] sm:$0xf]
  %v1218 = vld [vmem:[%s5 + $0x30] sm:$0xf]
  %v1219 = vld [vmem:[%s5 + $0x34] sm:$0xf]
  %v1220 = vld [vmem:[%s5 + $0x38] sm:$0xf]
  %v1221 = vld [vmem:[%s5 + $0x3c] sm:$0xf]
  %v1222 = vld [vmem:[%s5 + $0x40] sm:$0xf]
  %v1223 = vld [vmem:[%s5 + $0x44] sm:$0xf]
  %v1224 = vld [vmem:[%s5 + $0x48] sm:$0xf]
  %v1225 = vld [vmem:[%s5 + $0x4c] sm:$0xf]
  %v1226 = vld [vmem:[%s5 + $0x50] sm:$0xf]
  %v1227 = vld [vmem:[%s5 + $0x54] sm:$0xf]
  %v1228 = vld [vmem:[%s5 + $0x58] sm:$0xf]
  %v1229 = vld [vmem:[%s5 + $0x5c] sm:$0xf]
  %v1230 = vld [vmem:[%s5 + $0x60] sm:$0xf]
  %v1231 = vld [vmem:[%s5 + $0x64] sm:$0xf]
  %v1232 = vld [vmem:[%s5 + $0x68] sm:$0xf]
  %v1233 = vld [vmem:[%s5 + $0x6c] sm:$0xf]
  %v1234 = vld [vmem:[%s5 + $0x70] sm:$0xf]
  %v1235 = vld [vmem:[%s5 + $0x74] sm:$0xf]
  %v1236 = vld [vmem:[%s5 + $0x78] sm:$0xf]
  %v1237 = vld [vmem:[%s5 + $0x7c] sm:$0xf]
  %v1238 = vld [vmem:[%s5 + $0x80] sm:$0xf]
  %v1239 = vld [vmem:[%s5 + $0x84] sm:$0xf]
  %v1240 = vld [vmem:[%s5 + $0x88] sm:$0xf]
  %v1241 = vld [vmem:[%s5 + $0x8c] sm:$0xf]
  %v1242 = vld [vmem:[%s5 + $0x90] sm:$0xf]
  %v1243 = vld [vmem:[%s5 + $0x94] sm:$0xf]
  %v1244 = vld [vmem:[%s5 + $0x98] sm:$0xf]
  %v1245 = vld [vmem:[%s5 + $0x9c] sm:$0xf]
  %v1246 = vld [vmem:[%s5 + $0xa0] sm:$0xf]
  %v1247 = vld [vmem:[%s5 + $0xa4] sm:$0xf]
  %v1248 = vld [vmem:[%s5 + $0xa8] sm:$0xf]
  %v1249 = vld [vmem:[%s5 + $0xac] sm:$0xf]
  %v1250 = vld [vmem:[%s5 + $0xb0] sm:$0xf]
  %v1251 = vld [vmem:[%s5 + $0xb4] sm:$0xf]
  %v1252 = vld [vmem:[%s5 + $0xb8] sm:$0xf]
  %v1253 = vld [vmem:[%s5 + $0xbc] sm:$0xf]
  %v1254 = vld [vmem:[%s5 + $0xc0] sm:$0xf]
  %v1255 = vld [vmem:[%s5 + $0xc4] sm:$0xf]
  %v1256 = vld [vmem:[%s5 + $0xc8] sm:$0xf]
  %v1257 = vld [vmem:[%s5 + $0xcc] sm:$0xf]
  %v1258 = vld [vmem:[%s5 + $0xd0] sm:$0xf]
  %v1259 = vld [vmem:[%s5 + $0xd4] sm:$0xf]
  %v1260 = vld [vmem:[%s5 + $0xd8] sm:$0xf]
  %v1261 = vld [vmem:[%s5 + $0xdc] sm:$0xf]
  %v1262 = vld [vmem:[%s5 + $0xe0] sm:$0xf]
  %v1263 = vld [vmem:[%s5 + $0xe4] sm:$0xf]
  %v1264 = vld [vmem:[%s5 + $0xe8] sm:$0xf]
  %v1265 = vld [vmem:[%s5 + $0xec] sm:$0xf]
  %v1266 = vld [vmem:[%s5 + $0xf0] sm:$0xf]
  %v1267 = vld [vmem:[%s5 + $0xf4] sm:$0xf]
  %v1268 = vld [vmem:[%s5 + $0xf8] sm:$0xf]
  %v1269 = vld [vmem:[%s5 + $0xfc] sm:$0xf]
  %v1270 = vld [vmem:[%s5 + $0x100] sm:$0xf]
  %v1271 = vld [vmem:[%s5 + $0x104] sm:$0xf]
  %v1272 = vld [vmem:[%s5 + $0x108] sm:$0xf]
  %v1273 = vld [vmem:[%s5 + $0x10c] sm:$0xf]
  %v1274 = vld [vmem:[%s5 + $0x110] sm:$0xf]
  %v1275 = vld [vmem:[%s5 + $0x114] sm:$0xf]
  %v1276 = vld [vmem:[%s5 + $0x118] sm:$0xf]
  %v1277 = vld [vmem:[%s5 + $0x11c] sm:$0xf]
  %v1278 = vld [vmem:[%s6] sm:$0x1]
  %v1280 = vlaneseq
  %v1281 = vshrl.u32 %v1280, 7
  %v1282 = vsub.s32 0, %v1281
  %v1283 = vrot.slane %v1278, %v1282
  %v1357 = vunpack.c.l.b16 %v1206
  %v1358 = vunpack.c.l.b16 %v1207
  %v1359 = vunpack.c.l.b16 %v1208
  %v1360 = vunpack.c.l.b16 %v1209
  %v1361 = vunpack.c.l.b16 %v1210
  %v1362 = vunpack.c.l.b16 %v1211
  %v1363 = vunpack.c.l.b16 %v1212
  %v1364 = vunpack.c.l.b16 %v1213
  %v1365 = vunpack.c.l.b16 %v1214
  %v1366 = vunpack.c.l.b16 %v1215
  %v1367 = vunpack.c.l.b16 %v1216
  %v1368 = vunpack.c.l.b16 %v1217
  %v1369 = vunpack.c.l.b16 %v1218
  %v1370 = vunpack.c.l.b16 %v1219
  %v1371 = vunpack.c.l.b16 %v1220
  %v1372 = vunpack.c.l.b16 %v1221
  %v1373 = vunpack.c.l.b16 %v1222
  %v1374 = vunpack.c.l.b16 %v1223
  %v1375 = vunpack.c.l.b16 %v1224
  %v1376 = vunpack.c.l.b16 %v1225
  %v1377 = vunpack.c.l.b16 %v1226
  %v1378 = vunpack.c.l.b16 %v1227
  %v1379 = vunpack.c.l.b16 %v1228
  %v1380 = vunpack.c.l.b16 %v1229
  %v1381 = vunpack.c.l.b16 %v1230
  %v1382 = vunpack.c.l.b16 %v1231
  %v1383 = vunpack.c.l.b16 %v1232
  %v1384 = vunpack.c.l.b16 %v1233
  %v1385 = vunpack.c.l.b16 %v1234
  %v1386 = vunpack.c.l.b16 %v1235
  %v1387 = vunpack.c.l.b16 %v1236
  %v1388 = vunpack.c.l.b16 %v1237
  %v1389 = vunpack.c.l.b16 %v1238
  %v1390 = vunpack.c.l.b16 %v1239
  %v1391 = vunpack.c.l.b16 %v1240
  %v1392 = vunpack.c.l.b16 %v1241
  %v1393 = vunpack.c.l.b16 %v1242
  %v1394 = vunpack.c.l.b16 %v1243
  %v1395 = vunpack.c.l.b16 %v1244
  %v1396 = vunpack.c.l.b16 %v1245
  %v1397 = vunpack.c.l.b16 %v1246
  %v1398 = vunpack.c.l.b16 %v1247
  %v1399 = vunpack.c.l.b16 %v1248
  %v1400 = vunpack.c.l.b16 %v1249
  %v1401 = vunpack.c.l.b16 %v1250
  %v1402 = vunpack.c.l.b16 %v1251
  %v1403 = vunpack.c.l.b16 %v1252
  %v1404 = vunpack.c.l.b16 %v1253
  %v1405 = vunpack.c.l.b16 %v1254
  %v1406 = vunpack.c.l.b16 %v1255
  %v1407 = vunpack.c.l.b16 %v1256
  %v1408 = vunpack.c.l.b16 %v1257
  %v1409 = vunpack.c.l.b16 %v1258
  %v1410 = vunpack.c.l.b16 %v1259
  %v1411 = vunpack.c.l.b16 %v1260
  %v1412 = vunpack.c.l.b16 %v1261
  %v1413 = vunpack.c.l.b16 %v1262
  %v1414 = vunpack.c.l.b16 %v1263
  %v1415 = vunpack.c.l.b16 %v1264
  %v1416 = vunpack.c.l.b16 %v1265
  %v1417 = vunpack.c.l.b16 %v1266
  %v1418 = vunpack.c.l.b16 %v1267
  %v1419 = vunpack.c.l.b16 %v1268
  %v1420 = vunpack.c.l.b16 %v1269
  %v1421 = vunpack.c.l.b16 %v1270
  %v1422 = vunpack.c.l.b16 %v1271
  %v1423 = vunpack.c.l.b16 %v1272
  %v1424 = vunpack.c.l.b16 %v1273
  %v1425 = vunpack.c.l.b16 %v1274
  %v1426 = vunpack.c.l.b16 %v1275
  %v1427 = vunpack.c.l.b16 %v1276
  %v1428 = vunpack.c.l.b16 %v1277
  %v1429 = vpack.c.b16 %v1358, %v1357
  %v1430 = vpack.c.b16 %v1360, %v1359
  %v1431 = vpack.c.b16 %v1362, %v1361
  %v1432 = vpack.c.b16 %v1364, %v1363
  %v1433 = vpack.c.b16 %v1366, %v1365
  %v1434 = vpack.c.b16 %v1368, %v1367
  %v1435 = vpack.c.b16 %v1370, %v1369
  %v1436 = vpack.c.b16 %v1372, %v1371
  %v1437 = vpack.c.b16 %v1374, %v1373
  %v1438 = vpack.c.b16 %v1376, %v1375
  %v1439 = vpack.c.b16 %v1378, %v1377
  %v1440 = vpack.c.b16 %v1380, %v1379
  %v1441 = vpack.c.b16 %v1382, %v1381
  %v1442 = vpack.c.b16 %v1384, %v1383
  %v1443 = vpack.c.b16 %v1386, %v1385
  %v1444 = vpack.c.b16 %v1388, %v1387
  %v1445 = vpack.c.b16 %v1390, %v1389
  %v1446 = vpack.c.b16 %v1392, %v1391
  %v1447 = vpack.c.b16 %v1394, %v1393
  %v1448 = vpack.c.b16 %v1396, %v1395
  %v1449 = vpack.c.b16 %v1398, %v1397
  %v1450 = vpack.c.b16 %v1400, %v1399
  %v1451 = vpack.c.b16 %v1402, %v1401
  %v1452 = vpack.c.b16 %v1404, %v1403
  %v1453 = vpack.c.b16 %v1406, %v1405
  %v1454 = vpack.c.b16 %v1408, %v1407
  %v1455 = vpack.c.b16 %v1410, %v1409
  %v1456 = vpack.c.b16 %v1412, %v1411
  %v1457 = vpack.c.b16 %v1414, %v1413
  %v1458 = vpack.c.b16 %v1416, %v1415
  %v1459 = vpack.c.b16 %v1418, %v1417
  %v1460 = vpack.c.b16 %v1420, %v1419
  %v1461 = vpack.c.b16 %v1422, %v1421
  %v1462 = vpack.c.b16 %v1424, %v1423
  %v1463 = vpack.c.b16 %v1426, %v1425
  %v1464 = vpack.c.b16 %v1428, %v1427
  %v1502 = vsel %vm664, %v1200, 0
  %v1505 = vsel %vm664, %v1205, 0
  %1507 = vmatprep.subr.bf16.mxu0 0
  %1508 = vmatpush1.bf16.msra.mxu0 %v1436
  %1509 = vmatprep.subr.bf16.mxu0 0
  %1510 = vmatpush1.bf16.msra.mxu0 %v1435
  %1511 = vmatprep.subr.bf16.mxu0 0
  %1512 = vmatpush1.bf16.msra.mxu0 %v1434
  %1513 = vmatprep.subr.bf16.mxu0 0
  %1514 = vmatpush1.bf16.msra.mxu0 %v1433
  %1515 = vmatprep.subr.bf16.mxu0 0
  %1516 = vmatpush1.bf16.msra.mxu0 %v1432
  %1517 = vmatprep.subr.bf16.mxu0 0
  %1518 = vmatpush1.bf16.msra.mxu0 %v1431
  %1519 = vmatprep.subr.bf16.mxu0 0
  %1520 = vmatpush1.bf16.msra.mxu0 %v1430
  %1521 = vmatprep.subr.bf16.mxu0 0
  %1522 = vmatpush1.bf16.msra.mxu0 %v1429
  %1523 = vmatprep.subr.bf16.mxu0 0
  %1524 = vmatpush2.bf16.msra.mxu0 %v1444
  %1525 = vmatprep.subr.bf16.mxu0 0
  %1526 = vmatpush2.bf16.msra.mxu0 %v1443
  %1527 = vmatprep.subr.bf16.mxu0 0
  %1528 = vmatpush2.bf16.msra.mxu0 %v1442
  %1529 = vmatprep.subr.bf16.mxu0 0
  %1530 = vmatpush2.bf16.msra.mxu0 %v1441
  %1531 = vmatprep.subr.bf16.mxu0 0
  %1532 = vmatpush2.bf16.msra.mxu0 %v1440
  %1533 = vmatprep.subr.bf16.mxu0 0
  %1534 = vmatpush2.bf16.msra.mxu0 %v1439
  %1535 = vmatprep.subr.bf16.mxu0 0
  %1536 = vmatpush2.bf16.msra.mxu0 %v1438
  %1537 = vmatprep.subr.bf16.mxu0 0
  %1538 = vmatpush2.bf16.msra.mxu0 %v1437
  %1539 = vmatprep.mubr.bf16.mxu0 %v1197
  %1540 = vmatmul.mubr.bf16.gmra.mxu0 %v1196
  %v1541 = vpop.f32.mrf.mxu0
  %v1542 = vadd.f32 %v1283, %v1541
  %v1543 = vpop.f32.mrf.mxu0
  %v1544 = vpop.f32.mrf.mxu0
  %v1545 = vpop.f32.mrf.mxu0
  %1546 = vmatprep.mubr.bf16.mxu0 %v1202
  %1547 = vmatmul.mubr.bf16.gmra.mxu0 %v1201
  %v1548 = vpop.f32.mrf.mxu0
  %v1549 = vadd.f32 %v1283, %v1548
  %v1550 = vpop.f32.mrf.mxu0
  %v1551 = vpop.f32.mrf.mxu0
  %v1552 = vpop.f32.mrf.mxu0
  %1553 = vdwg.mxu0
  %1554 = vmatprep.subr.bf16.mxu0 0
  %1555 = vmatpush1.bf16.msra.mxu0 %v1452
  %1556 = vmatprep.subr.bf16.mxu0 0
  %1557 = vmatpush1.bf16.msra.mxu0 %v1451
  %1558 = vmatprep.subr.bf16.mxu0 0
  %1559 = vmatpush1.bf16.msra.mxu0 %v1450
  %1560 = vmatprep.subr.bf16.mxu0 0
  %1561 = vmatpush1.bf16.msra.mxu0 %v1449
  %1562 = vmatprep.subr.bf16.mxu0 0
  %1563 = vmatpush1.bf16.msra.mxu0 %v1448
  %1564 = vmatprep.subr.bf16.mxu0 0
  %1565 = vmatpush1.bf16.msra.mxu0 %v1447
  %1566 = vmatprep.subr.bf16.mxu0 0
  %1567 = vmatpush1.bf16.msra.mxu0 %v1446
  %1568 = vmatprep.subr.bf16.mxu0 0
  %1569 = vmatpush1.bf16.msra.mxu0 %v1445
  %1570 = vmatprep.subr.bf16.mxu0 0
  %1571 = vmatpush2.bf16.msra.mxu0 %v1460
  %1572 = vmatprep.subr.bf16.mxu0 0
  %1573 = vmatpush2.bf16.msra.mxu0 %v1459
  %1574 = vmatprep.subr.bf16.mxu0 0
  %1575 = vmatpush2.bf16.msra.mxu0 %v1458
  %1576 = vmatprep.subr.bf16.mxu0 0
  %1577 = vmatpush2.bf16.msra.mxu0 %v1457
  %1578 = vmatprep.subr.bf16.mxu0 0
  %1579 = vmatpush2.bf16.msra.mxu0 %v1456
  %1580 = vmatprep.subr.bf16.mxu0 0
  %1581 = vmatpush2.bf16.msra.mxu0 %v1455
  %1582 = vmatprep.subr.bf16.mxu0 0
  %1583 = vmatpush2.bf16.msra.mxu0 %v1454
  %1584 = vmatprep.subr.bf16.mxu0 0
  %1585 = vmatpush2.bf16.msra.mxu0 %v1453
  %1586 = vmatprep.mubr.bf16.mxu0 %v1199
  %1587 = vmatmul.mubr.bf16.gmra.mxu0 %v1198
  %v1588 = vpop.f32.mrf.mxu0
  %v1589 = vadd.f32 %v1542, %v1588
  %v1590 = vpop.f32.mrf.mxu0
  %v1591 = vpop.f32.mrf.mxu0
  %v1592 = vpop.f32.mrf.mxu0
  %1593 = vmatprep.mubr.bf16.mxu0 %v1204
  %1594 = vmatmul.mubr.bf16.gmra.mxu0 %v1203
  %v1595 = vpop.f32.mrf.mxu0
  %v1596 = vadd.f32 %v1549, %v1595
  %v1597 = vpop.f32.mrf.mxu0
  %v1598 = vpop.f32.mrf.mxu0
  %v1599 = vpop.f32.mrf.mxu0
  %1600 = vdwg.mxu0
  %1601 = vmatprep.subr.bf16.mxu0 0
  %1602 = vmatpush1.bf16.msra.mxu0 0
  %1603 = vmatprep.subr.bf16.mxu0 0
  %1604 = vmatpush1.bf16.msra.mxu0 0
  %1605 = vmatprep.subr.bf16.mxu0 0
  %1606 = vmatpush1.bf16.msra.mxu0 0
  %1607 = vmatprep.subr.bf16.mxu0 0
  %1608 = vmatpush1.bf16.msra.mxu0 0
  %1609 = vmatprep.subr.bf16.mxu0 0
  %1610 = vmatpush1.bf16.msra.mxu0 %v1464
  %1611 = vmatprep.subr.bf16.mxu0 0
  %1612 = vmatpush1.bf16.msra.mxu0 %v1463
  %1613 = vmatprep.subr.bf16.mxu0 0
  %1614 = vmatpush1.bf16.msra.mxu0 %v1462
  %1615 = vmatprep.subr.bf16.mxu0 0
  %1616 = vmatpush1.bf16.msra.mxu0 %v1461
  %1617 = vmatprep.subr.bf16.mxu0 0
  %1618 = vmatpush2.bf16.msra.mxu0 0
  %1619 = vmatprep.subr.bf16.mxu0 0
  %1620 = vmatpush2.bf16.msra.mxu0 0
  %1621 = vmatprep.subr.bf16.mxu0 0
  %1622 = vmatpush2.bf16.msra.mxu0 0
  %1623 = vmatprep.subr.bf16.mxu0 0
  %1624 = vmatpush2.bf16.msra.mxu0 0
  %1625 = vmatprep.subr.bf16.mxu0 0
  %1626 = vmatpush2.bf16.msra.mxu0 0
  %1627 = vmatprep.subr.bf16.mxu0 0
  %1628 = vmatpush2.bf16.msra.mxu0 0
  %1629 = vmatprep.subr.bf16.mxu0 0
  %1630 = vmatpush2.bf16.msra.mxu0 0
  %1631 = vmatprep.subr.bf16.mxu0 0
  %1632 = vmatpush2.bf16.msra.mxu0 0
  %1633 = vmatprep.mubr.bf16.mxu0 0
  %1634 = vmatmul.mubr.bf16.gmra.mxu0 %v1502
  %v1635 = vpop.f32.mrf.mxu0
  %v1636 = vadd.f32 %v1589, %v1635
  %v1637 = vpop.f32.mrf.mxu0
  %v1638 = vpop.f32.mrf.mxu0
  %v1639 = vpop.f32.mrf.mxu0
  %1640 = vmatprep.mubr.bf16.mxu0 0
  %1641 = vmatmul.mubr.bf16.gmra.mxu0 %v1505
  %v1642 = vpop.f32.mrf.mxu0
  %v1643 = vadd.f32 %v1596, %v1642
  %v1644 = vpop.f32.mrf.mxu0
  %v1645 = vpop.f32.mrf.mxu0
  %v1646 = vpop.f32.mrf.mxu0
  %1647 = vdwg.mxu0
  %v1648 = vmax.f32 %v1636, 0.0
  %v1649 = vmax.f32 %v1643, 0.0
  %v1651 = vrot.slane %v1649, 7
  %vm1653 = vcmask 1040384
  %v1654 = vsel %vm1653, %v1648, %v1651
  %v1655 = vld [vmem:[%s7] sm:$0xff]
  %v1656 = vld [vmem:[%s7 + $0x8] sm:$0xff]
  %v1657 = vld [vmem:[%s7 + $0x10] sm:$0xff]
  %v1658 = vld [vmem:[%s7 + $0x18] sm:$0xff]
  %v1659 = vld [vmem:[%s7 + $0x20] sm:$0xff]
  %v1660 = vld [vmem:[%s7 + $0x28] sm:$0xff]
  %v1661 = vld [vmem:[%s7 + $0x30] sm:$0xff]
  %v1662 = vld [vmem:[%s7 + $0x38] sm:$0xff]
  %v1663 = vld [vmem:[%s7 + $0x40] sm:$0xff]
  %v1664 = vld [vmem:[%s7 + $0x48] sm:$0xff]
  %v1665 = vld [vmem:[%s7 + $0x50] sm:$0xff]
  %v1666 = vld [vmem:[%s7 + $0x58] sm:$0xff]
  %v1667 = vld [vmem:[%s7 + $0x60] sm:$0xff]
  %v1668 = vld [vmem:[%s7 + $0x68] sm:$0xff]
  %v1669 = vld [vmem:[%s7 + $0x70] sm:$0xff]
  %v1670 = vld [vmem:[%s7 + $0x78] sm:$0xff]
  %v1671 = vld [vmem:[%s7 + $0x80] sm:$0xff]
  %v1672 = vld [vmem:[%s7 + $0x88] sm:$0xff]
  %v1673 = vld [vmem:[%s7 + $0x90] sm:$0xff]
  %v1674 = vld [vmem:[%s7 + $0x98] sm:$0xff]
  %v1675 = vld [vmem:[%s7 + $0xa0] sm:$0xff]
  %v1676 = vld [vmem:[%s7 + $0xa8] sm:$0xff]
  %v1677 = vld [vmem:[%s7 + $0xb0] sm:$0xff]
  %v1678 = vld [vmem:[%s7 + $0xb8] sm:$0xff]
  %v1679 = vld [vmem:[%s7 + $0xc0] sm:$0xff]
  %v1680 = vld [vmem:[%s7 + $0xc8] sm:$0xff]
  %v1681 = vld [vmem:[%s7 + $0xd0] sm:$0xff]
  %v1682 = vld [vmem:[%s7 + $0xd8] sm:$0xff]
  %v1683 = vld [vmem:[%s7 + $0xe0] sm:$0xff]
  %v1684 = vld [vmem:[%s7 + $0xe8] sm:$0xff]
  %v1685 = vld [vmem:[%s7 + $0xf0] sm:$0xff]
  %v1686 = vld [vmem:[%s7 + $0xf8] sm:$0xff]
  %v1687 = vld [vmem:[%s8] sm:$0xf]
  %v1689 = vlaneseq
  %v1690 = vshrl.u32 %v1689, 7
  %v1691 = vsub.s32 0, %v1690
  %v1692 = vrot.slane %v1687, %v1691
  %v1693 = vlaneseq
  %v1694 = vshrl.u32 %v1693, 7
  %v1695 = vsub.s32 1, %v1694
  %v1696 = vrot.slane %v1687, %v1695
  %v1697 = vlaneseq
  %v1698 = vshrl.u32 %v1697, 7
  %v1699 = vsub.s32 2, %v1698
  %v1700 = vrot.slane %v1687, %v1699
  %v1701 = vlaneseq
  %v1702 = vshrl.u32 %v1701, 7
  %v1703 = vsub.s32 3, %v1702
  %v1704 = vrot.slane %v1687, %v1703
  %v1710 = vsel %vm664, %v1654, 0
  %1712 = vmatprep.subr.mxu0 0.0
  %1713 = vmatpush1.msra.mxu0 0.0
  %1714 = vmatprep.subr.mxu0 0.0
  %1715 = vmatpush1.msra.mxu0 0.0
  %1716 = vmatprep.subr.mxu0 0.0
  %1717 = vmatpush1.msra.mxu0 0.0
  %1718 = vmatprep.subr.mxu0 0.0
  %1719 = vmatpush1.msra.mxu0 0.0
  %1720 = vmatprep.subr.mxu0 0.0
  %1721 = vmatpush1.msra.mxu0 0.0
  %1722 = vmatprep.subr.mxu0 0.0
  %1723 = vmatpush1.msra.mxu0 0.0
  %1724 = vmatprep.subr.mxu0 0.0
  %1725 = vmatpush1.msra.mxu0 0.0
  %1726 = vmatprep.subr.mxu0 0.0
  %1727 = vmatpush1.msra.mxu0 0.0
  %1728 = vmatprep.subr.mxu0 %v1684
  %1729 = vmatpush1.msra.mxu0 %v1683
  %1730 = vmatprep.subr.mxu0 %v1680
  %1731 = vmatpush1.msra.mxu0 %v1679
  %1732 = vmatprep.subr.mxu0 %v1676
  %1733 = vmatpush1.msra.mxu0 %v1675
  %1734 = vmatprep.subr.mxu0 %v1672
  %1735 = vmatpush1.msra.mxu0 %v1671
  %1736 = vmatprep.subr.mxu0 %v1668
  %1737 = vmatpush1.msra.mxu0 %v1667
  %1738 = vmatprep.subr.mxu0 %v1664
  %1739 = vmatpush1.msra.mxu0 %v1663
  %1740 = vmatprep.subr.mxu0 %v1660
  %1741 = vmatpush1.msra.mxu0 %v1659
  %1742 = vmatprep.subr.mxu0 %v1656
  %1743 = vmatpush1.msra.mxu0 %v1655
  %1744 = vmatprep.subr.mxu0 0.0
  %1745 = vmatpush2.msra.mxu0 0.0
  %1746 = vmatprep.subr.mxu0 0.0
  %1747 = vmatpush2.msra.mxu0 0.0
  %1748 = vmatprep.subr.mxu0 0.0
  %1749 = vmatpush2.msra.mxu0 0.0
  %1750 = vmatprep.subr.mxu0 0.0
  %1751 = vmatpush2.msra.mxu0 0.0
  %1752 = vmatprep.subr.mxu0 0.0
  %1753 = vmatpush2.msra.mxu0 0.0
  %1754 = vmatprep.subr.mxu0 0.0
  %1755 = vmatpush2.msra.mxu0 0.0
  %1756 = vmatprep.subr.mxu0 0.0
  %1757 = vmatpush2.msra.mxu0 0.0
  %1758 = vmatprep.subr.mxu0 0.0
  %1759 = vmatpush2.msra.mxu0 0.0
  %1760 = vmatprep.subr.mxu0 0.0
  %1761 = vmatpush2.msra.mxu0 0.0
  %1762 = vmatprep.subr.mxu0 0.0
  %1763 = vmatpush2.msra.mxu0 0.0
  %1764 = vmatprep.subr.mxu0 0.0
  %1765 = vmatpush2.msra.mxu0 0.0
  %1766 = vmatprep.subr.mxu0 0.0
  %1767 = vmatpush2.msra.mxu0 0.0
  %1768 = vmatprep.subr.mxu0 0.0
  %1769 = vmatpush2.msra.mxu0 0.0
  %1770 = vmatprep.subr.mxu0 0.0
  %1771 = vmatpush2.msra.mxu0 0.0
  %1772 = vmatprep.subr.mxu0 0.0
  %1773 = vmatpush2.msra.mxu0 0.0
  %1774 = vmatprep.subr.mxu0 0.0
  %1775 = vmatpush2.msra.mxu0 0.0
  %1776 = vmatprep.mubr.f32.mxu0 0.0
  %1777 = vmatmul.mubr.f32.gmra.mxu0 %v1710
  %v1778 = vpop.f32.mrf.mxu0
  %v1779 = vadd.f32 %v1692, %v1778
  %v1780 = vpop.f32.mrf.mxu0
  %v1781 = vadd.f32 %v1696, %v1780
  %1782 = vdwg.mxu0
  %1783 = vmatprep.subr.mxu0 0.0
  %1784 = vmatpush1.msra.mxu0 0.0
  %1785 = vmatprep.subr.mxu0 0.0
  %1786 = vmatpush1.msra.mxu0 0.0
  %1787 = vmatprep.subr.mxu0 0.0
  %1788 = vmatpush1.msra.mxu0 0.0
  %1789 = vmatprep.subr.mxu0 0.0
  %1790 = vmatpush1.msra.mxu0 0.0
  %1791 = vmatprep.subr.mxu0 0.0
  %1792 = vmatpush1.msra.mxu0 0.0
  %1793 = vmatprep.subr.mxu0 0.0
  %1794 = vmatpush1.msra.mxu0 0.0
  %1795 = vmatprep.subr.mxu0 0.0
  %1796 = vmatpush1.msra.mxu0 0.0
  %1797 = vmatprep.subr.mxu0 0.0
  %1798 = vmatpush1.msra.mxu0 0.0
  %1799 = vmatprep.subr.mxu0 %v1686
  %1800 = vmatpush1.msra.mxu0 %v1685
  %1801 = vmatprep.subr.mxu0 %v1682
  %1802 = vmatpush1.msra.mxu0 %v1681
  %1803 = vmatprep.subr.mxu0 %v1678
  %1804 = vmatpush1.msra.mxu0 %v1677
  %1805 = vmatprep.subr.mxu0 %v1674
  %1806 = vmatpush1.msra.mxu0 %v1673
  %1807 = vmatprep.subr.mxu0 %v1670
  %1808 = vmatpush1.msra.mxu0 %v1669
  %1809 = vmatprep.subr.mxu0 %v1666
  %1810 = vmatpush1.msra.mxu0 %v1665
  %1811 = vmatprep.subr.mxu0 %v1662
  %1812 = vmatpush1.msra.mxu0 %v1661
  %1813 = vmatprep.subr.mxu0 %v1658
  %1814 = vmatpush1.msra.mxu0 %v1657
  %1815 = vmatprep.subr.mxu0 0.0
  %1816 = vmatpush2.msra.mxu0 0.0
  %1817 = vmatprep.subr.mxu0 0.0
  %1818 = vmatpush2.msra.mxu0 0.0
  %1819 = vmatprep.subr.mxu0 0.0
  %1820 = vmatpush2.msra.mxu0 0.0
  %1821 = vmatprep.subr.mxu0 0.0
  %1822 = vmatpush2.msra.mxu0 0.0
  %1823 = vmatprep.subr.mxu0 0.0
  %1824 = vmatpush2.msra.mxu0 0.0
  %1825 = vmatprep.subr.mxu0 0.0
  %1826 = vmatpush2.msra.mxu0 0.0
  %1827 = vmatprep.subr.mxu0 0.0
  %1828 = vmatpush2.msra.mxu0 0.0
  %1829 = vmatprep.subr.mxu0 0.0
  %1830 = vmatpush2.msra.mxu0 0.0
  %1831 = vmatprep.subr.mxu0 0.0
  %1832 = vmatpush2.msra.mxu0 0.0
  %1833 = vmatprep.subr.mxu0 0.0
  %1834 = vmatpush2.msra.mxu0 0.0
  %1835 = vmatprep.subr.mxu0 0.0
  %1836 = vmatpush2.msra.mxu0 0.0
  %1837 = vmatprep.subr.mxu0 0.0
  %1838 = vmatpush2.msra.mxu0 0.0
  %1839 = vmatprep.subr.mxu0 0.0
  %1840 = vmatpush2.msra.mxu0 0.0
  %1841 = vmatprep.subr.mxu0 0.0
  %1842 = vmatpush2.msra.mxu0 0.0
  %1843 = vmatprep.subr.mxu0 0.0
  %1844 = vmatpush2.msra.mxu0 0.0
  %1845 = vmatprep.subr.mxu0 0.0
  %1846 = vmatpush2.msra.mxu0 0.0
  %1847 = vmatprep.mubr.f32.mxu0 0.0
  %1848 = vmatmul.mubr.f32.gmra.mxu0 %v1710
  %v1849 = vpop.f32.mrf.mxu0
  %v1850 = vadd.f32 %v1700, %v1849
  %v1851 = vpop.f32.mrf.mxu0
  %v1852 = vadd.f32 %v1704, %v1851
  %1853 = vdwg.mxu0
  %v1854 = vmax.f32 %v1779, 0.0
  %v1855 = vmax.f32 %v1781, 0.0
  %v1856 = vmax.f32 %v1850, 0.0
  %v1857 = vmax.f32 %v1852, 0.0
  %v1858 = vld [vmem:[%s9] sm:$0xff]
  %v1859 = vld [vmem:[%s9 + $0x8] sm:$0xff]
  %v1860 = vld [vmem:[%s9 + $0x10] sm:$0xff]
  %v1861 = vld [vmem:[%s9 + $0x18] sm:$0xff]
  %v1862 = vld [vmem:[%s9 + $0x20] sm:$0xff]
  %v1863 = vld [vmem:[%s9 + $0x28] sm:$0xff]
  %v1864 = vld [vmem:[%s9 + $0x30] sm:$0xff]
  %v1865 = vld [vmem:[%s9 + $0x38] sm:$0xff]
  %v1866 = vld [vmem:[%s9 + $0x40] sm:$0xff]
  %v1867 = vld [vmem:[%s9 + $0x48] sm:$0xff]
  %v1868 = vld [vmem:[%s9 + $0x50] sm:$0xff]
  %v1869 = vld [vmem:[%s9 + $0x58] sm:$0xff]
  %v1870 = vld [vmem:[%s9 + $0x60] sm:$0xff]
  %v1871 = vld [vmem:[%s9 + $0x68] sm:$0xff]
  %v1872 = vld [vmem:[%s9 + $0x70] sm:$0xff]
  %v1873 = vld [vmem:[%s9 + $0x78] sm:$0xff]
  %v1874 = vld [vmem:[%s9 + $0x80] sm:$0xff]
  %v1875 = vld [vmem:[%s9 + $0x88] sm:$0xff]
  %v1876 = vld [vmem:[%s9 + $0x90] sm:$0xff]
  %v1877 = vld [vmem:[%s9 + $0x98] sm:$0xff]
  %v1878 = vld [vmem:[%s9 + $0xa0] sm:$0xff]
  %v1879 = vld [vmem:[%s9 + $0xa8] sm:$0xff]
  %v1880 = vld [vmem:[%s9 + $0xb0] sm:$0xff]
  %v1881 = vld [vmem:[%s9 + $0xb8] sm:$0xff]
  %v1882 = vld [vmem:[%s9 + $0xc0] sm:$0xff]
  %v1883 = vld [vmem:[%s9 + $0xc8] sm:$0xff]
  %v1884 = vld [vmem:[%s9 + $0xd0] sm:$0xff]
  %v1885 = vld [vmem:[%s9 + $0xd8] sm:$0xff]
  %v1886 = vld [vmem:[%s9 + $0xe0] sm:$0xff]
  %v1887 = vld [vmem:[%s9 + $0xe8] sm:$0xff]
  %v1888 = vld [vmem:[%s9 + $0xf0] sm:$0xff]
  %v1889 = vld [vmem:[%s9 + $0xf8] sm:$0xff]
  %v1890 = vld [vmem:[%s9 + $0x100] sm:$0xff]
  %v1891 = vld [vmem:[%s9 + $0x108] sm:$0xff]
  %v1892 = vld [vmem:[%s9 + $0x110] sm:$0xff]
  %v1893 = vld [vmem:[%s9 + $0x118] sm:$0xff]
  %v1894 = vld [vmem:[%s9 + $0x120] sm:$0xff]
  %v1895 = vld [vmem:[%s9 + $0x128] sm:$0xff]
  %v1896 = vld [vmem:[%s9 + $0x130] sm:$0xff]
  %v1897 = vld [vmem:[%s9 + $0x138] sm:$0xff]
  %v1898 = vld [vmem:[%s9 + $0x140] sm:$0xff]
  %v1899 = vld [vmem:[%s9 + $0x148] sm:$0xff]
  %v1900 = vld [vmem:[%s9 + $0x150] sm:$0xff]
  %v1901 = vld [vmem:[%s9 + $0x158] sm:$0xff]
  %v1902 = vld [vmem:[%s9 + $0x160] sm:$0xff]
  %v1903 = vld [vmem:[%s9 + $0x168] sm:$0xff]
  %v1904 = vld [vmem:[%s9 + $0x170] sm:$0xff]
  %v1905 = vld [vmem:[%s9 + $0x178] sm:$0xff]
  %v1906 = vld [vmem:[%s9 + $0x180] sm:$0xff]
  %v1907 = vld [vmem:[%s9 + $0x188] sm:$0xff]
  %v1908 = vld [vmem:[%s9 + $0x190] sm:$0xff]
  %v1909 = vld [vmem:[%s9 + $0x198] sm:$0xff]
  %v1910 = vld [vmem:[%s9 + $0x1a0] sm:$0xff]
  %v1911 = vld [vmem:[%s9 + $0x1a8] sm:$0xff]
  %v1912 = vld [vmem:[%s9 + $0x1b0] sm:$0xff]
  %v1913 = vld [vmem:[%s9 + $0x1b8] sm:$0xff]
  %v1914 = vld [vmem:[%s9 + $0x1c0] sm:$0xff]
  %v1915 = vld [vmem:[%s9 + $0x1c8] sm:$0xff]
  %v1916 = vld [vmem:[%s9 + $0x1d0] sm:$0xff]
  %v1917 = vld [vmem:[%s9 + $0x1d8] sm:$0xff]
  %v1918 = vld [vmem:[%s9 + $0x1e0] sm:$0xff]
  %v1919 = vld [vmem:[%s9 + $0x1e8] sm:$0xff]
  %v1920 = vld [vmem:[%s9 + $0x1f0] sm:$0xff]
  %v1921 = vld [vmem:[%s9 + $0x1f8] sm:$0xff]
  %v1922 = vld [vmem:[%s10] sm:$0x1]
  %v1924 = vlaneseq
  %v1925 = vshrl.u32 %v1924, 7
  %v1926 = vsub.s32 0, %v1925
  %v1927 = vrot.slane %v1922, %v1926
  %1929 = vmatprep.subr.mxu0 0.0
  %1930 = vmatpush1.msra.mxu0 %v1873
  %1931 = vmatprep.subr.mxu0 0.0
  %1932 = vmatpush1.msra.mxu0 %v1872
  %1933 = vmatprep.subr.mxu0 0.0
  %1934 = vmatpush1.msra.mxu0 %v1871
  %1935 = vmatprep.subr.mxu0 0.0
  %1936 = vmatpush1.msra.mxu0 %v1870
  %1937 = vmatprep.subr.mxu0 0.0
  %1938 = vmatpush1.msra.mxu0 %v1869
  %1939 = vmatprep.subr.mxu0 0.0
  %1940 = vmatpush1.msra.mxu0 %v1868
  %1941 = vmatprep.subr.mxu0 0.0
  %1942 = vmatpush1.msra.mxu0 %v1867
  %1943 = vmatprep.subr.mxu0 0.0
  %1944 = vmatpush1.msra.mxu0 %v1866
  %1945 = vmatprep.subr.mxu0 0.0
  %1946 = vmatpush1.msra.mxu0 %v1865
  %1947 = vmatprep.subr.mxu0 0.0
  %1948 = vmatpush1.msra.mxu0 %v1864
  %1949 = vmatprep.subr.mxu0 0.0
  %1950 = vmatpush1.msra.mxu0 %v1863
  %1951 = vmatprep.subr.mxu0 0.0
  %1952 = vmatpush1.msra.mxu0 %v1862
  %1953 = vmatprep.subr.mxu0 0.0
  %1954 = vmatpush1.msra.mxu0 %v1861
  %1955 = vmatprep.subr.mxu0 0.0
  %1956 = vmatpush1.msra.mxu0 %v1860
  %1957 = vmatprep.subr.mxu0 0.0
  %1958 = vmatpush1.msra.mxu0 %v1859
  %1959 = vmatprep.subr.mxu0 0.0
  %1960 = vmatpush1.msra.mxu0 %v1858
  %1961 = vmatprep.subr.mxu0 0.0
  %1962 = vmatpush2.msra.mxu0 %v1889
  %1963 = vmatprep.subr.mxu0 0.0
  %1964 = vmatpush2.msra.mxu0 %v1888
  %1965 = vmatprep.subr.mxu0 0.0
  %1966 = vmatpush2.msra.mxu0 %v1887
  %1967 = vmatprep.subr.mxu0 0.0
  %1968 = vmatpush2.msra.mxu0 %v1886
  %1969 = vmatprep.subr.mxu0 0.0
  %1970 = vmatpush2.msra.mxu0 %v1885
  %1971 = vmatprep.subr.mxu0 0.0
  %1972 = vmatpush2.msra.mxu0 %v1884
  %1973 = vmatprep.subr.mxu0 0.0
  %1974 = vmatpush2.msra.mxu0 %v1883
  %1975 = vmatprep.subr.mxu0 0.0
  %1976 = vmatpush2.msra.mxu0 %v1882
  %1977 = vmatprep.subr.mxu0 0.0
  %1978 = vmatpush2.msra.mxu0 %v1881
  %1979 = vmatprep.subr.mxu0 0.0
  %1980 = vmatpush2.msra.mxu0 %v1880
  %1981 = vmatprep.subr.mxu0 0.0
  %1982 = vmatpush2.msra.mxu0 %v1879
  %1983 = vmatprep.subr.mxu0 0.0
  %1984 = vmatpush2.msra.mxu0 %v1878
  %1985 = vmatprep.subr.mxu0 0.0
  %1986 = vmatpush2.msra.mxu0 %v1877
  %1987 = vmatprep.subr.mxu0 0.0
  %1988 = vmatpush2.msra.mxu0 %v1876
  %1989 = vmatprep.subr.mxu0 0.0
  %1990 = vmatpush2.msra.mxu0 %v1875
  %1991 = vmatprep.subr.mxu0 0.0
  %1992 = vmatpush2.msra.mxu0 %v1874
  %1993 = vmatprep.mubr.f32.mxu0 %v1855
  %1994 = vmatmul.mubr.f32.gmra.mxu0 %v1854
  %v1995 = vpop.f32.mrf.mxu0
  %v1996 = vadd.f32 %v1927, %v1995
  %v1997 = vpop.f32.mrf.mxu0
  %1998 = vdwg.mxu0
  %1999 = vmatprep.subr.mxu0 0.0
  %2000 = vmatpush1.msra.mxu0 %v1905
  %2001 = vmatprep.subr.mxu0 0.0
  %2002 = vmatpush1.msra.mxu0 %v1904
  %2003 = vmatprep.subr.mxu0 0.0
  %2004 = vmatpush1.msra.mxu0 %v1903
  %2005 = vmatprep.subr.mxu0 0.0
  %2006 = vmatpush1.msra.mxu0 %v1902
  %2007 = vmatprep.subr.mxu0 0.0
  %2008 = vmatpush1.msra.mxu0 %v1901
  %2009 = vmatprep.subr.mxu0 0.0
  %2010 = vmatpush1.msra.mxu0 %v1900
  %2011 = vmatprep.subr.mxu0 0.0
  %2012 = vmatpush1.msra.mxu0 %v1899
  %2013 = vmatprep.subr.mxu0 0.0
  %2014 = vmatpush1.msra.mxu0 %v1898
  %2015 = vmatprep.subr.mxu0 0.0
  %2016 = vmatpush1.msra.mxu0 %v1897
  %2017 = vmatprep.subr.mxu0 0.0
  %2018 = vmatpush1.msra.mxu0 %v1896
  %2019 = vmatprep.subr.mxu0 0.0
  %2020 = vmatpush1.msra.mxu0 %v1895
  %2021 = vmatprep.subr.mxu0 0.0
  %2022 = vmatpush1.msra.mxu0 %v1894
  %2023 = vmatprep.subr.mxu0 0.0
  %2024 = vmatpush1.msra.mxu0 %v1893
  %2025 = vmatprep.subr.mxu0 0.0
  %2026 = vmatpush1.msra.mxu0 %v1892
  %2027 = vmatprep.subr.mxu0 0.0
  %2028 = vmatpush1.msra.mxu0 %v1891
  %2029 = vmatprep.subr.mxu0 0.0
  %2030 = vmatpush1.msra.mxu0 %v1890
  %2031 = vmatprep.subr.mxu0 0.0
  %2032 = vmatpush2.msra.mxu0 %v1921
  %2033 = vmatprep.subr.mxu0 0.0
  %2034 = vmatpush2.msra.mxu0 %v1920
  %2035 = vmatprep.subr.mxu0 0.0
  %2036 = vmatpush2.msra.mxu0 %v1919
  %2037 = vmatprep.subr.mxu0 0.0
  %2038 = vmatpush2.msra.mxu0 %v1918
  %2039 = vmatprep.subr.mxu0 0.0
  %2040 = vmatpush2.msra.mxu0 %v1917
  %2041 = vmatprep.subr.mxu0 0.0
  %2042 = vmatpush2.msra.mxu0 %v1916
  %2043 = vmatprep.subr.mxu0 0.0
  %2044 = vmatpush2.msra.mxu0 %v1915
  %2045 = vmatprep.subr.mxu0 0.0
  %2046 = vmatpush2.msra.mxu0 %v1914
  %2047 = vmatprep.subr.mxu0 0.0
  %2048 = vmatpush2.msra.mxu0 %v1913
  %2049 = vmatprep.subr.mxu0 0.0
  %2050 = vmatpush2.msra.mxu0 %v1912
  %2051 = vmatprep.subr.mxu0 0.0
  %2052 = vmatpush2.msra.mxu0 %v1911
  %2053 = vmatprep.subr.mxu0 0.0
  %2054 = vmatpush2.msra.mxu0 %v1910
  %2055 = vmatprep.subr.mxu0 0.0
  %2056 = vmatpush2.msra.mxu0 %v1909
  %2057 = vmatprep.subr.mxu0 0.0
  %2058 = vmatpush2.msra.mxu0 %v1908
  %2059 = vmatprep.subr.mxu0 0.0
  %2060 = vmatpush2.msra.mxu0 %v1907
  %2061 = vmatprep.subr.mxu0 0.0
  %2062 = vmatpush2.msra.mxu0 %v1906
  %2063 = vmatprep.mubr.f32.mxu0 %v1857
  %2064 = vmatmul.mubr.f32.gmra.mxu0 %v1856
  %v2065 = vpop.f32.mrf.mxu0
  %v2066 = vadd.f32 %v1996, %v2065
  %v2067 = vpop.f32.mrf.mxu0
  %2068 = vdwg.mxu0
  %v2069 = vlaneseq
  %v2070 = vand.u32 %v2069, 127
  %vm2071 = vcmp.ge.s32.totalorder %v2070, 1
  %vm2072 = vcmp.lt.s32.totalorder %v2070, 7
  %vm2073 = vmand %vm2071, %vm2072
  %v2074 = vsel %vm2073, %v2066, -1e+30
  %v2075 = vsel %vm1134, %v2074, -inf
  %2076 = vmax.xlane.f32.xlu0 %v2075
  %v2077 = vpop.xlane.xlu0 %2076
  %v2078 = vsub.f32 %v2074, %v2077
  %v2079 = vmul.f32 %v2078, 1.442695
  %v2080 = vpow.pop %v2079
  %v2081 = vsel %vm1134, %v2080, 0.0
  %2082 = vadd.xlane.f32.xlu0 %v2081
  %v2083 = vpop.xlane.xlu0 %2082
  %v2084 = vrcp.pop %v2083
  %v2085 = vmul.f32 %v2080, %v2084
  %vm2086 = vcmp.eq.s32.totalorder %v2070, 0
  %v2087 = vsel %vm2086, %v2066, %v2085
  %2088 = vst [vmem:[%s11] sm:$0x3] %v2087
  // Predicated region
  $region46: #{actor_critic_forward.1} parent=0 // pred_check
    _
  $region47: #{actor_critic_forward.1} parent=0 // pred_check_branch
    %2090 = sbr.rel (0) target = $region49
  $region48: #{actor_critic_forward.1} parent=0 // pred_region
    _
  $region49: #{actor_critic_forward.1} parent=0 // pred_fallthru
    _
  // Predicated region
  $region50: #{actor_critic_forward.1} parent=0 // pred_check
    _
  $region51: #{actor_critic_forward.1} parent=0 // pred_check_branch
    %2092 = sbr.rel (0) target = $region53
  $region52: #{actor_critic_forward.1} parent=0 // pred_region
    _
  $region53: #{actor_critic_forward.1} parent=0 // pred_fallthru
    _

</llo_original>
